<compile_context>
chip_gen: v7x
topology: tpu7x:2x2x1
jax: 0.10.0
libtpu: 0.0.40
codegen_flags: <defaults>
</compile_context>

<pallas_src>
import math

import jax
import jax.numpy as jnp
import numpy as np
from jax.experimental import pallas as pl
from jax.experimental.pallas import tpu as pltpu

_INV_SQRT2 = 1.0 / math.sqrt(2.0)


def _round_up(x: int, m: int) -> int:
    return ((x + m - 1) // m) * m


def _make_dual_head_kernel(n_text: int, n_sent: int, class_pad: int,
                           dot_dtype, approx_gelu: bool):
    """Fused two-head kernel; class counts / dtypes / GELU flavor are static."""

    def _argmax_rows(logits, row0, n_classes):
        # Unrolled compare/select over a tiny static class axis (sublane rows).
        # Strict '>' keeps the first occurrence on ties, matching torch.argmax.
        best_val = logits[row0:row0 + 1, :]                    # [1, TB]
        best_idx = jnp.zeros((1, logits.shape[1]), jnp.int32)
        for c in range(1, n_classes):
            v = logits[row0 + c:row0 + c + 1, :]
            take = v > best_val
            best_val = jnp.where(take, v, best_val)
            best_idx = jnp.where(take, jnp.int32(c), best_idx)
        return best_idx                                        # [1, TB]

    def kernel(x_ref, w1_ref, b1_ref, w2_ref, b2_ref, out_ref):
        xt = x_ref[...].astype(dot_dtype)                      # [TB, D] natural layout
        # hidden_both = W1_both @ x^T  -> [2H, TB]; batch on lanes, f32 acc.
        h = jax.lax.dot_general(
            w1_ref[...], xt,
            dimension_numbers=(((1,), (1,)), ((), ())),
            preferred_element_type=jnp.float32)
        h = h + b1_ref[...]                                    # [2H, 1] bcast over lanes
        if approx_gelu:
            # tanh GELU -> EUP (throughput path; may flip razor-thin ties).
            h = jax.nn.gelu(h, approximate=True)
        else:
            # Exact erf GELU -> matches torch.nn.GELU() bit-for-bit.
            h = 0.5 * h * (1.0 + jax.lax.erf(h * _INV_SQRT2))
        # logits_both = W2_both (block-diag) @ hidden_both -> [2*class_pad, TB]
        logits = jnp.dot(w2_ref[...], h.astype(dot_dtype),
                         preferred_element_type=jnp.float32)
        logits = logits + b2_ref[...]
        # Padded class rows carry zero weights & bias but never enter the
        # unrolled argmax loops below, so they cannot win.
        out_ref[0:1, :] = _argmax_rows(logits, 0, n_text)          # text head
        out_ref[1:2, :] = _argmax_rows(logits, class_pad, n_sent)  # sentiment head

    return kernel


def _pack_params(text_params, sent_params, class_pad: int, dot_dtype):
    """Stacks torch-layout params of both heads.

    text/sent params: (w1 [H,D], b1 [H], w2 [C,H], b2 [C]) each.
    Returns W1_both [2H,D], b1_both [2H,1], block-diag W2_both [2*Cp, 2H],
    b2_both [2*Cp, 1].
    """
    w1a, b1a, w2a, b2a = text_params
    w1b, b1b, w2b, b2b = sent_params
    H, _ = w1a.shape
    Ca, Cb = w2a.shape[0], w2b.shape[0]

    w1_both = jnp.concatenate(
        [jnp.asarray(w1a, jnp.float32), jnp.asarray(w1b, jnp.float32)],
        axis=0).astype(dot_dtype)                              # [2H, D]
    b1_both = jnp.concatenate(
        [jnp.asarray(b1a, jnp.float32), jnp.asarray(b1b, jnp.float32)],
        axis=0).reshape(2 * H, 1)                              # f32

    w2_both = jnp.zeros((2 * class_pad, 2 * H), jnp.float32)
    w2_both = w2_both.at[:Ca, :H].set(jnp.asarray(w2a, jnp.float32))
    w2_both = w2_both.at[class_pad:class_pad + Cb, H:].set(
        jnp.asarray(w2b, jnp.float32))
    w2_both = w2_both.astype(dot_dtype)                        # [2*Cp, 2H]

    b2_both = jnp.zeros((2 * class_pad, 1), jnp.float32)
    b2_both = b2_both.at[:Ca, 0].set(jnp.asarray(b2a, jnp.float32))
    b2_both = b2_both.at[class_pad:class_pad + Cb, 0].set(
        jnp.asarray(b2b, jnp.float32))
    return w1_both, b1_both, w2_both, b2_both


def dual_classifier_pallas(x, text_params, sent_params, *,
                           batch_tile: int = 512,     # 512-1024 for large B
                           class_pad: int = 8,
                           use_bf16_matmul: bool = False):
    """x: [B, 384] embeddings.  Returns (text_pred [B] i32, sent_pred [B] i32)."""
    B, D_in = x.shape
    H = text_params[0].shape[0]
    n_text = text_params[2].shape[0]
    n_sent = sent_params[2].shape[0]
    assert n_text <= class_pad and n_sent <= class_pad
    dot_dtype = jnp.bfloat16 if use_bf16_matmul else jnp.float32

    # Batch tiling: single rounded-up tile for small B, else multiples of the
    # (128-aligned) batch_tile.  Partial last tiles are handled by Pallas
    # (padded block reads; the wrapper slices outputs back to [:B]).
    if B <= batch_tile:
        tb = _round_up(max(B, 8), 8)
        n_tiles = 1
    else:
        assert batch_tile % 128 == 0, "batch_tile must be a multiple of 128"
        tb = batch_tile
        n_tiles = pl.cdiv(B, tb)
    b_pad = n_tiles * tb

    w1_both, b1_both, w2_both, b2_both = _pack_params(
        text_params, sent_params, class_pad, dot_dtype)

    resident = lambda shape: pl.BlockSpec(shape, lambda i: (0, 0))  # VMEM-resident
    # NOTE: resident specs could use pipeline_mode=pl.Buffered(1) to skip the
    # unused second buffer (~0.6 MB); omitted — plenty of VMEM headroom.

    in_bytes = (x.size * x.dtype.itemsize
                + sum(a.size * a.dtype.itemsize
                      for a in (w1_both, b1_both, w2_both, b2_both)))
    cost = pl.CostEstimate(
        flops=int(2 * b_pad * (2 * H) * D_in + 2 * b_pad * (2 * class_pad) * (2 * H)),
        transcendentals=int(b_pad * 2 * H),          # one GELU per hidden unit
        bytes_accessed=int(in_bytes + 2 * b_pad * 4),
    )

    kernel = _make_dual_head_kernel(n_text, n_sent, class_pad, dot_dtype,
                                    approx_gelu=use_bf16_matmul)

    out = pl.pallas_call(
        kernel,
        out_shape=jax.ShapeDtypeStruct((2, b_pad), jnp.int32),
        grid_spec=pltpu.PrefetchScalarGridSpec(
            num_scalar_prefetch=0,
            grid=(n_tiles,),
            in_specs=[
                pl.BlockSpec((tb, D_in), lambda i: (i, 0)),     # x tile (natural layout)
                resident((2 * H, D_in)),                        # stacked W1
                resident((2 * H, 1)),                           # stacked b1
                resident((2 * class_pad, 2 * H)),               # block-diag W2
                resident((2 * class_pad, 1)),                   # stacked b2
            ],
            out_specs=pl.BlockSpec((2, tb), lambda i: (0, i)),  # lane-dense, both heads
        ),
        compiler_params=pltpu.CompilerParams(
            # On v7x, substitute pltpu.CORE_PARALLEL here if "parallel" does
            # not shard the batch tiles across both TensorCores.
            dimension_semantics=("parallel",),
        ),
        cost_estimate=cost,
    )(x, w1_both, b1_both, w2_both, b2_both)

    return out[0, :B], out[1, :B]


# ---------------------------------------------------------------------------
# Pure-JAX reference mirroring the PyTorch FeedForwardMLP head (f32, erf GELU).
# ---------------------------------------------------------------------------
def _reference_head(x, w1, b1, w2, b2):
    h = x @ w1.T + b1
    h = 0.5 * h * (1.0 + jax.lax.erf(h * _INV_SQRT2))
    logits = h @ w2.T + b2
    return jnp.argmax(logits, axis=1).astype(jnp.int32)


def _xavier_uniform(key, fan_out, fan_in):
    limit = math.sqrt(6.0 / (fan_in + fan_out))
    return jax.random.uniform(key, (fan_out, fan_in), jnp.float32, -limit, limit)


if __name__ == "__main__":
    embed_dim, hidden_dim = 384, 192
    n_text_classes, n_sent_classes = 6, 3      # DualClassifier: topic / sentiment heads
    batch = 200                                # not a multiple of 8/128 -> exercises
                                               # the ragged-tile handling

    key = jax.random.PRNGKey(0)
    kx, k1, k2, k3, k4 = jax.random.split(key, 5)
    x = jax.random.normal(kx, (batch, embed_dim), jnp.float32)

    # Deterministic params mirroring FeedForwardMLP.__init__ (torch layouts).
    text_params = (_xavier_uniform(k1, hidden_dim, embed_dim),
                   jnp.full((hidden_dim,), 0.02, jnp.float32),
                   _xavier_uniform(k2, n_text_classes, hidden_dim),
                   jnp.full((n_text_classes,), 0.02, jnp.float32))
    sent_params = (_xavier_uniform(k3, hidden_dim, embed_dim),
                   jnp.full((hidden_dim,), 0.02, jnp.float32),
                   _xavier_uniform(k4, n_sent_classes, hidden_dim),
                   jnp.full((n_sent_classes,), 0.02, jnp.float32))

    ref_text = jax.block_until_ready(_reference_head(x, *text_params))
    ref_sent = jax.block_until_ready(_reference_head(x, *sent_params))

    # f32 / exact-erf path (single tile): must reproduce the PyTorch argmax.
    text_pred, sent_pred = dual_classifier_pallas(x, text_params, sent_params)
    text_pred, sent_pred = jax.block_until_ready((text_pred, sent_pred))
    np.testing.assert_array_equal(np.asarray(text_pred), np.asarray(ref_text))
    np.testing.assert_array_equal(np.asarray(sent_pred), np.asarray(ref_sent))

    # Same path with a small batch_tile to exercise the multi-tile pipeline
    # (2 grid steps, partial last tile).
    t_mt, s_mt = dual_classifier_pallas(x, text_params, sent_params, batch_tile=128)
    t_mt, s_mt = jax.block_until_ready((t_mt, s_mt))
    np.testing.assert_array_equal(np.asarray(t_mt), np.asarray(ref_text))
    np.testing.assert_array_equal(np.asarray(s_mt), np.asarray(ref_sent))

    # bf16-MXU + tanh-GELU throughput path (v5e/v6e/v7x): approximate — argmax
    # can only differ from the f32 reference on razor-thin logit ties, so
    # sanity-check shape/range and agreement rate here.
    t16, s16 = dual_classifier_pallas(x, text_params, sent_params,
                                      use_bf16_matmul=True)
    t16, s16 = jax.block_until_ready((t16, s16))
    assert t16.shape == (batch,) and s16.shape == (batch,)
    assert 0 <= int(jnp.min(t16)) and int(jnp.max(t16)) < n_text_classes
    assert 0 <= int(jnp.min(s16)) and int(jnp.max(s16)) < n_sent_classes
    assert float(jnp.mean((t16 == ref_text).astype(jnp.float32))) > 0.95
    assert float(jnp.mean((s16 == ref_sent).astype(jnp.float32))) > 0.95

    print("KERNEL_OK")
</pallas_src>

<mosaic_0001>
module attributes {stable_mosaic.version = 11 : i64} {
  func.func @kernel(%arg0: i32, %arg1: memref<200x384xf32, #tpu.memory_space<vmem>>, %arg2: memref<384x384xf32, #tpu.memory_space<vmem>>, %arg3: memref<384x1xf32, #tpu.memory_space<vmem>>, %arg4: memref<16x384xf32, #tpu.memory_space<vmem>>, %arg5: memref<16x1xf32, #tpu.memory_space<vmem>>, %arg6: memref<2x200xi32, #tpu.memory_space<vmem>>) attributes {dimension_semantics = [#tpu.dimension_semantics<parallel>], iteration_bounds = array<i64: 1>, scalar_prefetch = 0 : i64, scratch_operands = 0 : i64, tpu.core_type = #tpu.core_type<tc>, window_params = [{transform_indices = @transform_0, window_bounds = array<i64: 200, 384>}, {pipeline_mode = #tpu.pipeline_mode<synchronous>, transform_indices = @transform_1, window_bounds = array<i64: 384, 384>}, {pipeline_mode = #tpu.pipeline_mode<synchronous>, transform_indices = @transform_2, window_bounds = array<i64: 384, 1>}, {pipeline_mode = #tpu.pipeline_mode<synchronous>, transform_indices = @transform_3, window_bounds = array<i64: 16, 384>}, {pipeline_mode = #tpu.pipeline_mode<synchronous>, transform_indices = @transform_4, window_bounds = array<i64: 16, 1>}, {transform_indices = @transform_5, window_bounds = array<i64: 2, 200>}]} {
    %c0 = arith.constant 0 : index
    %c0_0 = arith.constant 0 : index
    %0 = vector.load %arg1[%c0, %c0_0] : memref<200x384xf32, #tpu.memory_space<vmem>>, vector<200x384xf32>
    %c0_1 = arith.constant 0 : index
    %c0_2 = arith.constant 0 : index
    %1 = vector.load %arg2[%c0_1, %c0_2] : memref<384x384xf32, #tpu.memory_space<vmem>>, vector<384x384xf32>
    %cst = arith.constant dense<0.000000e+00> : vector<384x200xf32>
    %2 = tpu.matmul %1, %0, %cst {dimension_numbers = #tpu.dot_dimension_numbers<[1], [1], [0], [0], [0, 0, 1, 0], [], []>} : vector<384x384xf32>, vector<200x384xf32>, vector<384x200xf32> -> vector<384x200xf32>
    %c0_3 = arith.constant 0 : index
    %c0_4 = arith.constant 0 : index
    %3 = vector.load %arg3[%c0_3, %c0_4] : memref<384x1xf32, #tpu.memory_space<vmem>>, vector<384x1xf32>
    %4 = vector.broadcast %3 : vector<384x1xf32> to vector<384x200xf32>
    %5 = arith.addf %2, %4 : vector<384x200xf32>
    %cst_5 = arith.constant 5.000000e-01 : f32
    %6 = vector.broadcast %cst_5 : f32 to vector<384x200xf32>
    %7 = arith.mulf %6, %5 : vector<384x200xf32>
    %cst_6 = arith.constant 0.707106769 : f32
    %8 = vector.broadcast %cst_6 : f32 to vector<384x200xf32>
    %9 = arith.mulf %5, %8 : vector<384x200xf32>
    %10 = math.erf %9 : vector<384x200xf32>
    %cst_7 = arith.constant 1.000000e+00 : f32
    %11 = vector.broadcast %cst_7 : f32 to vector<384x200xf32>
    %12 = arith.addf %11, %10 : vector<384x200xf32>
    %13 = arith.mulf %7, %12 : vector<384x200xf32>
    %c0_8 = arith.constant 0 : index
    %c0_9 = arith.constant 0 : index
    %14 = vector.load %arg4[%c0_8, %c0_9] : memref<16x384xf32, #tpu.memory_space<vmem>>, vector<16x384xf32>
    %cst_10 = arith.constant dense<0.000000e+00> : vector<16x200xf32>
    %15 = tpu.matmul %14, %13, %cst_10 {dimension_numbers = #tpu.dot_dimension_numbers<[1], [0], [0], [1], [0, 0, 1, 1], [], []>} : vector<16x384xf32>, vector<384x200xf32>, vector<16x200xf32> -> vector<16x200xf32>
    %c0_11 = arith.constant 0 : index
    %c0_12 = arith.constant 0 : index
    %16 = vector.load %arg5[%c0_11, %c0_12] : memref<16x1xf32, #tpu.memory_space<vmem>>, vector<16x1xf32>
    %17 = vector.broadcast %16 : vector<16x1xf32> to vector<16x200xf32>
    %18 = arith.addf %15, %17 : vector<16x200xf32>
    %19 = vector.extract_strided_slice %18 {offsets = [0, 0], sizes = [1, 200], strides = [1, 1]} : vector<16x200xf32> to vector<1x200xf32>
    %c0_i32 = arith.constant 0 : i32
    %20 = vector.broadcast %c0_i32 : i32 to vector<1x200xi32>
    %21 = vector.extract_strided_slice %18 {offsets = [1, 0], sizes = [1, 200], strides = [1, 1]} : vector<16x200xf32> to vector<1x200xf32>
    %22 = arith.cmpf ogt, %21, %19 : vector<1x200xf32>
    %23 = arith.select %22, %21, %19 : vector<1x200xi1>, vector<1x200xf32>
    %c1_i32 = arith.constant 1 : i32
    %24 = vector.broadcast %c1_i32 : i32 to vector<1x200xi32>
    %25 = arith.select %22, %24, %20 : vector<1x200xi1>, vector<1x200xi32>
    %26 = vector.extract_strided_slice %18 {offsets = [2, 0], sizes = [1, 200], strides = [1, 1]} : vector<16x200xf32> to vector<1x200xf32>
    %27 = arith.cmpf ogt, %26, %23 : vector<1x200xf32>
    %28 = arith.select %27, %26, %23 : vector<1x200xi1>, vector<1x200xf32>
    %c2_i32 = arith.constant 2 : i32
    %29 = vector.broadcast %c2_i32 : i32 to vector<1x200xi32>
    %30 = arith.select %27, %29, %25 : vector<1x200xi1>, vector<1x200xi32>
    %31 = vector.extract_strided_slice %18 {offsets = [3, 0], sizes = [1, 200], strides = [1, 1]} : vector<16x200xf32> to vector<1x200xf32>
    %32 = arith.cmpf ogt, %31, %28 : vector<1x200xf32>
    %33 = arith.select %32, %31, %28 : vector<1x200xi1>, vector<1x200xf32>
    %c3_i32 = arith.constant 3 : i32
    %34 = vector.broadcast %c3_i32 : i32 to vector<1x200xi32>
    %35 = arith.select %32, %34, %30 : vector<1x200xi1>, vector<1x200xi32>
    %36 = vector.extract_strided_slice %18 {offsets = [4, 0], sizes = [1, 200], strides = [1, 1]} : vector<16x200xf32> to vector<1x200xf32>
    %37 = arith.cmpf ogt, %36, %33 : vector<1x200xf32>
    %38 = arith.select %37, %36, %33 : vector<1x200xi1>, vector<1x200xf32>
    %c4_i32 = arith.constant 4 : i32
    %39 = vector.broadcast %c4_i32 : i32 to vector<1x200xi32>
    %40 = arith.select %37, %39, %35 : vector<1x200xi1>, vector<1x200xi32>
    %41 = vector.extract_strided_slice %18 {offsets = [5, 0], sizes = [1, 200], strides = [1, 1]} : vector<16x200xf32> to vector<1x200xf32>
    %42 = arith.cmpf ogt, %41, %38 : vector<1x200xf32>
    %c5_i32 = arith.constant 5 : i32
    %43 = vector.broadcast %c5_i32 : i32 to vector<1x200xi32>
    %44 = arith.select %42, %43, %40 : vector<1x200xi1>, vector<1x200xi32>
    %c0_13 = arith.constant 0 : index
    %c0_14 = arith.constant 0 : index
    %45 = vector.load %arg6[%c0_13, %c0_14] : memref<2x200xi32, #tpu.memory_space<vmem>>, vector<1x200xi32>
    tpu.vector_store %arg6[%c0_13, %c0_14], %44 {strides = array<i32>} : memref<2x200xi32, #tpu.memory_space<vmem>>, vector<1x200xi32>,
    %46 = vector.extract_strided_slice %18 {offsets = [8, 0], sizes = [1, 200], strides = [1, 1]} : vector<16x200xf32> to vector<1x200xf32>
    %c0_i32_15 = arith.constant 0 : i32
    %47 = vector.broadcast %c0_i32_15 : i32 to vector<1x200xi32>
    %48 = vector.extract_strided_slice %18 {offsets = [9, 0], sizes = [1, 200], strides = [1, 1]} : vector<16x200xf32> to vector<1x200xf32>
    %49 = arith.cmpf ogt, %48, %46 : vector<1x200xf32>
    %50 = arith.select %49, %48, %46 : vector<1x200xi1>, vector<1x200xf32>
    %c1_i32_16 = arith.constant 1 : i32
    %51 = vector.broadcast %c1_i32_16 : i32 to vector<1x200xi32>
    %52 = arith.select %49, %51, %47 : vector<1x200xi1>, vector<1x200xi32>
    %53 = vector.extract_strided_slice %18 {offsets = [10, 0], sizes = [1, 200], strides = [1, 1]} : vector<16x200xf32> to vector<1x200xf32>
    %54 = arith.cmpf ogt, %53, %50 : vector<1x200xf32>
    %c2_i32_17 = arith.constant 2 : i32
    %55 = vector.broadcast %c2_i32_17 : i32 to vector<1x200xi32>
    %56 = arith.select %54, %55, %52 : vector<1x200xi1>, vector<1x200xi32>
    %c1 = arith.constant 1 : index
    %c0_18 = arith.constant 0 : index
    %57 = vector.load %arg6[%c1, %c0_18] : memref<2x200xi32, #tpu.memory_space<vmem>>, vector<1x200xi32>
    tpu.vector_store %arg6[%c1, %c0_18], %56 {strides = array<i32>} : memref<2x200xi32, #tpu.memory_space<vmem>>, vector<1x200xi32>,
    return
  }
  func.func @transform_0(%arg0: i32) -> (i32, i32) {
    %c0_i32 = arith.constant 0 : i32
    %c0_i32_0 = arith.constant 0 : i32
    return %arg0, %c0_i32 : i32, i32
  }
  func.func @transform_1(%arg0: i32) -> (i32, i32) {
    %c0_i32 = arith.constant 0 : i32
    %c0_i32_0 = arith.constant 0 : i32
    %c0_i32_1 = arith.constant 0 : i32
    return %c0_i32, %c0_i32_0 : i32, i32
  }
  func.func @transform_2(%arg0: i32) -> (i32, i32) {
    %c0_i32 = arith.constant 0 : i32
    %c0_i32_0 = arith.constant 0 : i32
    %c0_i32_1 = arith.constant 0 : i32
    return %c0_i32, %c0_i32_0 : i32, i32
  }
  func.func @transform_3(%arg0: i32) -> (i32, i32) {
    %c0_i32 = arith.constant 0 : i32
    %c0_i32_0 = arith.constant 0 : i32
    %c0_i32_1 = arith.constant 0 : i32
    return %c0_i32, %c0_i32_0 : i32, i32
  }
  func.func @transform_4(%arg0: i32) -> (i32, i32) {
    %c0_i32 = arith.constant 0 : i32
    %c0_i32_0 = arith.constant 0 : i32
    %c0_i32_1 = arith.constant 0 : i32
    return %c0_i32, %c0_i32_0 : i32, i32
  }
  func.func @transform_5(%arg0: i32) -> (i32, i32) {
    %c0_i32 = arith.constant 0 : i32
    %c0_i32_0 = arith.constant 0 : i32
    return %c0_i32, %arg0 : i32, i32
  }
}

</mosaic_0001>

<llo_original>
// kernel: tpu_custom_call.1
$region0: #{tpu_custom_call.1}
  #allocation0 [shape = 'u32[]', space=smem, size = 0x4, offset = 0x4, fixed_abs, tag = 'smem constant byte address 0x4 - core index']
  #allocation1 [shape = 'u32[144,128]{1,0:T(1,128)}', space=vmem, size = 0x12000, scoped, tag = 'internal scratch']
  %s0 = inlined_call_operand.hbm [shape: f32[200,384], index: 0, kind: input, shape index: {}]
  %s1 = inlined_call_operand.hbm [shape: f32[384,384], index: 1, kind: input, shape index: {}]
  %s2 = inlined_call_operand.vmem [shape: f32[384,1], index: 2, kind: input, shape index: {}]
  %s3 = inlined_call_operand.vmem [shape: f32[16,384], index: 3, kind: input, shape index: {}]
  %s4 = inlined_call_operand.vmem [shape: f32[16,1], index: 4, kind: input, shape index: {}]
  %s5 = inlined_call_operand.hbm [shape: s32[2,200], index: 5, kind: output, shape index: {}]
  %s6 = sld [smem:[#allocation0]]
  $region38: #{tpu_custom_call.1} parent=0
    _
  %s8 = ssub.s32 1, %s6
  %s9 = scalar_select 0, %s8, %s6
  $region1: #{tpu_custom_call.1} parent=0
    #allocation2 [shape = 'u8[307200]{0}', space=vmem, size = 0x4b000, scoped, tag = 'input window, operand 0, single buffered']
    #allocation3 [shape = 's32[1]{0}', space=sflag, size = 0x4, scoped, tag = 'scoped memory for tpu_custom_call.1']
    #allocation4 [shape = 's32[1]{0}', space=sflag, size = 0x4, scoped, tag = 'scoped memory for tpu_custom_call.1']
    #allocation5 [shape = 'u8[589824]{0}', space=vmem, size = 0x90000, scoped, tag = 'input window, operand 1, single buffered']
    #allocation6 [shape = 's32[1]{0}', space=sflag, size = 0x4, scoped, tag = 'scoped memory for tpu_custom_call.1']
    #allocation7 [shape = 'u8[2048]{0}', space=vmem, size = 0x800, scoped, tag = 'output window, operand 0, single buffered']
    %10 = vsyncpa [#allocation3], 0
    %11 = vsyncpa [#allocation6], 0
    %12 = vsyncpa [#allocation4], 0
    // Predicated region
    $region2: #{tpu_custom_call.1} parent=1 // pred_check
      _
    $region3: #{tpu_custom_call.1} parent=1 // pred_check_branch
      %14 = sbr.rel (0) target = $region5
    $region4: #{tpu_custom_call.1} parent=1 // pred_region
      %s16 = ssub.s32 9600, 9600
      %17 = vsyncadd [#allocation3], %s16
      %s18 = sshll.u32 [#allocation2], 4
      %s19 = int_to_ptr.vmem [resolvable:$true] %s18
      %24 = dma.hbm_to_vmem [thread:$0]  %s0, 9600, %s19, [#allocation3], 384, 384, 24
    $region5: #{tpu_custom_call.1} parent=1 // pred_fallthru
      _
    // Predicated region
    $region6: #{tpu_custom_call.1} parent=1 // pred_check
      _
    $region7: #{tpu_custom_call.1} parent=1 // pred_check_branch
      %26 = sbr.rel (0) target = $region9
    $region8: #{tpu_custom_call.1} parent=1 // pred_region
      %s28 = ssub.s32 18432, 18432
      %29 = vsyncadd [#allocation6], %s28
      %s30 = sshll.u32 [#allocation5], 4
      %s31 = int_to_ptr.vmem [resolvable:$true] %s30
      %36 = dma.hbm_to_vmem [thread:$0]  %s1, 18432, %s31, [#allocation6], 384, 384, 24
    $region9: #{tpu_custom_call.1} parent=1 // pred_fallthru
      _
    // Predicated region
    $region10: #{tpu_custom_call.1} parent=1 // pred_check
      _
    $region11: #{tpu_custom_call.1} parent=1 // pred_check_branch
      %38 = sbr.rel (0) target = $region13
    $region12: #{tpu_custom_call.1} parent=1 // pred_region
      _
    $region13: #{tpu_custom_call.1} parent=1 // pred_fallthru
      _
    // Predicated region
    $region14: #{tpu_custom_call.1} parent=1 // pred_check
      _
    $region15: #{tpu_custom_call.1} parent=1 // pred_check_branch
      %40 = sbr.rel (0) target = $region17
    $region16: #{tpu_custom_call.1} parent=1 // pred_region
      _
    $region17: #{tpu_custom_call.1} parent=1 // pred_fallthru
      _
    // Predicated region
    $region18: #{tpu_custom_call.1} parent=1 // pred_check
      _
    $region19: #{tpu_custom_call.1} parent=1 // pred_check_branch
      %42 = sbr.rel (0) target = $region21
    $region20: #{tpu_custom_call.1} parent=1 // pred_region
      _
    $region21: #{tpu_custom_call.1} parent=1 // pred_fallthru
      _
    // Predicated region
    $region22: #{tpu_custom_call.1} parent=1 // pred_check
      _
    $region23: #{tpu_custom_call.1} parent=1 // pred_check_branch
      %44 = sbr.rel (0) target = $region25
    $region24: #{tpu_custom_call.1} parent=1 // pred_region
      %45 = dma.done [#allocation3], 9600
    $region25: #{tpu_custom_call.1} parent=1 // pred_fallthru
      _
    // Predicated region
    $region26: #{tpu_custom_call.1} parent=1 // pred_check
      _
    $region27: #{tpu_custom_call.1} parent=1 // pred_check_branch
      %47 = sbr.rel (0) target = $region29
    $region28: #{tpu_custom_call.1} parent=1 // pred_region
      %48 = dma.done [#allocation6], 18432
    $region29: #{tpu_custom_call.1} parent=1 // pred_fallthru
      _
    %v49 = vld [vmem:[#allocation2] sm:$0xff]
    %v50 = vld [vmem:[#allocation2 + $0x8] sm:$0xff]
    %v51 = vld [vmem:[#allocation2 + $0x10] sm:$0xff]
    %v52 = vld [vmem:[#allocation2 + $0x18] sm:$0xff]
    %v53 = vld [vmem:[#allocation2 + $0x20] sm:$0xff]
    %v54 = vld [vmem:[#allocation2 + $0x28] sm:$0xff]
    %v55 = vld [vmem:[#allocation2 + $0x30] sm:$0xff]
    %v56 = vld [vmem:[#allocation2 + $0x38] sm:$0xff]
    %v57 = vld [vmem:[#allocation2 + $0x40] sm:$0xff]
    %v58 = vld [vmem:[#allocation2 + $0x48] sm:$0xff]
    %v59 = vld [vmem:[#allocation2 + $0x50] sm:$0xff]
    %v60 = vld [vmem:[#allocation2 + $0x58] sm:$0xff]
    %v61 = vld [vmem:[#allocation2 + $0x60] sm:$0xff]
    %v62 = vld [vmem:[#allocation2 + $0x68] sm:$0xff]
    %v63 = vld [vmem:[#allocation2 + $0x70] sm:$0xff]
    %v64 = vld [vmem:[#allocation2 + $0x78] sm:$0xff]
    %v65 = vld [vmem:[#allocation2 + $0x80] sm:$0xff]
    %v66 = vld [vmem:[#allocation2 + $0x88] sm:$0xff]
    %v67 = vld [vmem:[#allocation2 + $0x90] sm:$0xff]
    %v68 = vld [vmem:[#allocation2 + $0x98] sm:$0xff]
    %v69 = vld [vmem:[#allocation2 + $0xa0] sm:$0xff]
    %v70 = vld [vmem:[#allocation2 + $0xa8] sm:$0xff]
    %v71 = vld [vmem:[#allocation2 + $0xb0] sm:$0xff]
    %v72 = vld [vmem:[#allocation2 + $0xb8] sm:$0xff]
    %v73 = vld [vmem:[#allocation2 + $0xc0] sm:$0xff]
    %v74 = vld [vmem:[#allocation2 + $0xc8] sm:$0xff]
    %v75 = vld [vmem:[#allocation2 + $0xd0] sm:$0xff]
    %v76 = vld [vmem:[#allocation2 + $0xd8] sm:$0xff]
    %v77 = vld [vmem:[#allocation2 + $0xe0] sm:$0xff]
    %v78 = vld [vmem:[#allocation2 + $0xe8] sm:$0xff]
    %v79 = vld [vmem:[#allocation2 + $0xf0] sm:$0xff]
    %v80 = vld [vmem:[#allocation2 + $0xf8] sm:$0xff]
    %v81 = vld [vmem:[#allocation2 + $0x100] sm:$0xff]
    %v82 = vld [vmem:[#allocation2 + $0x108] sm:$0xff]
    %v83 = vld [vmem:[#allocation2 + $0x110] sm:$0xff]
    %v84 = vld [vmem:[#allocation2 + $0x118] sm:$0xff]
    %v85 = vld [vmem:[#allocation2 + $0x120] sm:$0xff]
    %v86 = vld [vmem:[#allocation2 + $0x128] sm:$0xff]
    %v87 = vld [vmem:[#allocation2 + $0x130] sm:$0xff]
    %v88 = vld [vmem:[#allocation2 + $0x138] sm:$0xff]
    %v89 = vld [vmem:[#allocation2 + $0x140] sm:$0xff]
    %v90 = vld [vmem:[#allocation2 + $0x148] sm:$0xff]
    %v91 = vld [vmem:[#allocation2 + $0x150] sm:$0xff]
    %v92 = vld [vmem:[#allocation2 + $0x158] sm:$0xff]
    %v93 = vld [vmem:[#allocation2 + $0x160] sm:$0xff]
    %v94 = vld [vmem:[#allocation2 + $0x168] sm:$0xff]
    %v95 = vld [vmem:[#allocation2 + $0x170] sm:$0xff]
    %v96 = vld [vmem:[#allocation2 + $0x178] sm:$0xff]
    %v97 = vld [vmem:[#allocation2 + $0x180] sm:$0xff]
    %v98 = vld [vmem:[#allocation2 + $0x188] sm:$0xff]
    %v99 = vld [vmem:[#allocation2 + $0x190] sm:$0xff]
    %v100 = vld [vmem:[#allocation2 + $0x198] sm:$0xff]
    %v101 = vld [vmem:[#allocation2 + $0x1a0] sm:$0xff]
    %v102 = vld [vmem:[#allocation2 + $0x1a8] sm:$0xff]
    %v103 = vld [vmem:[#allocation2 + $0x1b0] sm:$0xff]
    %v104 = vld [vmem:[#allocation2 + $0x1b8] sm:$0xff]
    %v105 = vld [vmem:[#allocation2 + $0x1c0] sm:$0xff]
    %v106 = vld [vmem:[#allocation2 + $0x1c8] sm:$0xff]
    %v107 = vld [vmem:[#allocation2 + $0x1d0] sm:$0xff]
    %v108 = vld [vmem:[#allocation2 + $0x1d8] sm:$0xff]
    %v109 = vld [vmem:[#allocation2 + $0x1e0] sm:$0xff]
    %v110 = vld [vmem:[#allocation2 + $0x1e8] sm:$0xff]
    %v111 = vld [vmem:[#allocation2 + $0x1f0] sm:$0xff]
    %v112 = vld [vmem:[#allocation2 + $0x1f8] sm:$0xff]
    %v113 = vld [vmem:[#allocation2 + $0x200] sm:$0xff]
    %v114 = vld [vmem:[#allocation2 + $0x208] sm:$0xff]
    %v115 = vld [vmem:[#allocation2 + $0x210] sm:$0xff]
    %v116 = vld [vmem:[#allocation2 + $0x218] sm:$0xff]
    %v117 = vld [vmem:[#allocation2 + $0x220] sm:$0xff]
    %v118 = vld [vmem:[#allocation2 + $0x228] sm:$0xff]
    %v119 = vld [vmem:[#allocation2 + $0x230] sm:$0xff]
    %v120 = vld [vmem:[#allocation2 + $0x238] sm:$0xff]
    %v121 = vld [vmem:[#allocation2 + $0x240] sm:$0xff]
    %v122 = vld [vmem:[#allocation2 + $0x248] sm:$0xff]
    %v123 = vld [vmem:[#allocation2 + $0x250] sm:$0xff]
    %v124 = vld [vmem:[#allocation5] sm:$0xff]
    %v125 = vld [vmem:[#allocation5 + $0x8] sm:$0xff]
    %v126 = vld [vmem:[#allocation5 + $0x10] sm:$0xff]
    %v127 = vld [vmem:[#allocation5 + $0x18] sm:$0xff]
    %v128 = vld [vmem:[#allocation5 + $0x20] sm:$0xff]
    %v129 = vld [vmem:[#allocation5 + $0x28] sm:$0xff]
    %v130 = vld [vmem:[#allocation5 + $0x30] sm:$0xff]
    %v131 = vld [vmem:[#allocation5 + $0x38] sm:$0xff]
    %v132 = vld [vmem:[#allocation5 + $0x40] sm:$0xff]
    %v133 = vld [vmem:[#allocation5 + $0x48] sm:$0xff]
    %v134 = vld [vmem:[#allocation5 + $0x50] sm:$0xff]
    %v135 = vld [vmem:[#allocation5 + $0x58] sm:$0xff]
    %v136 = vld [vmem:[#allocation5 + $0x60] sm:$0xff]
    %v137 = vld [vmem:[#allocation5 + $0x68] sm:$0xff]
    %v138 = vld [vmem:[#allocation5 + $0x70] sm:$0xff]
    %v139 = vld [vmem:[#allocation5 + $0x78] sm:$0xff]
    %v140 = vld [vmem:[#allocation5 + $0x80] sm:$0xff]
    %v141 = vld [vmem:[#allocation5 + $0x88] sm:$0xff]
    %v142 = vld [vmem:[#allocation5 + $0x90] sm:$0xff]
    %v143 = vld [vmem:[#allocation5 + $0x98] sm:$0xff]
    %v144 = vld [vmem:[#allocation5 + $0xa0] sm:$0xff]
    %v145 = vld [vmem:[#allocation5 + $0xa8] sm:$0xff]
    %v146 = vld [vmem:[#allocation5 + $0xb0] sm:$0xff]
    %v147 = vld [vmem:[#allocation5 + $0xb8] sm:$0xff]
    %v148 = vld [vmem:[#allocation5 + $0xc0] sm:$0xff]
    %v149 = vld [vmem:[#allocation5 + $0xc8] sm:$0xff]
    %v150 = vld [vmem:[#allocation5 + $0xd0] sm:$0xff]
    %v151 = vld [vmem:[#allocation5 + $0xd8] sm:$0xff]
    %v152 = vld [vmem:[#allocation5 + $0xe0] sm:$0xff]
    %v153 = vld [vmem:[#allocation5 + $0xe8] sm:$0xff]
    %v154 = vld [vmem:[#allocation5 + $0xf0] sm:$0xff]
    %v155 = vld [vmem:[#allocation5 + $0xf8] sm:$0xff]
    %v156 = vld [vmem:[#allocation5 + $0x100] sm:$0xff]
    %v157 = vld [vmem:[#allocation5 + $0x108] sm:$0xff]
    %v158 = vld [vmem:[#allocation5 + $0x110] sm:$0xff]
    %v159 = vld [vmem:[#allocation5 + $0x118] sm:$0xff]
    %v160 = vld [vmem:[#allocation5 + $0x120] sm:$0xff]
    %v161 = vld [vmem:[#allocation5 + $0x128] sm:$0xff]
    %v162 = vld [vmem:[#allocation5 + $0x130] sm:$0xff]
    %v163 = vld [vmem:[#allocation5 + $0x138] sm:$0xff]
    %v164 = vld [vmem:[#allocation5 + $0x140] sm:$0xff]
    %v165 = vld [vmem:[#allocation5 + $0x148] sm:$0xff]
    %v166 = vld [vmem:[#allocation5 + $0x150] sm:$0xff]
    %v167 = vld [vmem:[#allocation5 + $0x158] sm:$0xff]
    %v168 = vld [vmem:[#allocation5 + $0x160] sm:$0xff]
    %v169 = vld [vmem:[#allocation5 + $0x168] sm:$0xff]
    %v170 = vld [vmem:[#allocation5 + $0x170] sm:$0xff]
    %v171 = vld [vmem:[#allocation5 + $0x178] sm:$0xff]
    %v172 = vld [vmem:[#allocation5 + $0x180] sm:$0xff]
    %v173 = vld [vmem:[#allocation5 + $0x188] sm:$0xff]
    %v174 = vld [vmem:[#allocation5 + $0x190] sm:$0xff]
    %v175 = vld [vmem:[#allocation5 + $0x198] sm:$0xff]
    %v176 = vld [vmem:[#allocation5 + $0x1a0] sm:$0xff]
    %v177 = vld [vmem:[#allocation5 + $0x1a8] sm:$0xff]
    %v178 = vld [vmem:[#allocation5 + $0x1b0] sm:$0xff]
    %v179 = vld [vmem:[#allocation5 + $0x1b8] sm:$0xff]
    %v180 = vld [vmem:[#allocation5 + $0x1c0] sm:$0xff]
    %v181 = vld [vmem:[#allocation5 + $0x1c8] sm:$0xff]
    %v182 = vld [vmem:[#allocation5 + $0x1d0] sm:$0xff]
    %v183 = vld [vmem:[#allocation5 + $0x1d8] sm:$0xff]
    %v184 = vld [vmem:[#allocation5 + $0x1e0] sm:$0xff]
    %v185 = vld [vmem:[#allocation5 + $0x1e8] sm:$0xff]
    %v186 = vld [vmem:[#allocation5 + $0x1f0] sm:$0xff]
    %v187 = vld [vmem:[#allocation5 + $0x1f8] sm:$0xff]
    %v188 = vld [vmem:[#allocation5 + $0x200] sm:$0xff]
    %v189 = vld [vmem:[#allocation5 + $0x208] sm:$0xff]
    %v190 = vld [vmem:[#allocation5 + $0x210] sm:$0xff]
    %v191 = vld [vmem:[#allocation5 + $0x218] sm:$0xff]
    %v192 = vld [vmem:[#allocation5 + $0x220] sm:$0xff]
    %v193 = vld [vmem:[#allocation5 + $0x228] sm:$0xff]
    %v194 = vld [vmem:[#allocation5 + $0x230] sm:$0xff]
    %v195 = vld [vmem:[#allocation5 + $0x238] sm:$0xff]
    %v196 = vld [vmem:[#allocation5 + $0x240] sm:$0xff]
    %v197 = vld [vmem:[#allocation5 + $0x248] sm:$0xff]
    %v198 = vld [vmem:[#allocation5 + $0x250] sm:$0xff]
    %v199 = vld [vmem:[#allocation5 + $0x258] sm:$0xff]
    %v200 = vld [vmem:[#allocation5 + $0x260] sm:$0xff]
    %v201 = vld [vmem:[#allocation5 + $0x268] sm:$0xff]
    %v202 = vld [vmem:[#allocation5 + $0x270] sm:$0xff]
    %v203 = vld [vmem:[#allocation5 + $0x278] sm:$0xff]
    %v204 = vld [vmem:[#allocation5 + $0x280] sm:$0xff]
    %v205 = vld [vmem:[#allocation5 + $0x288] sm:$0xff]
    %v206 = vld [vmem:[#allocation5 + $0x290] sm:$0xff]
    %v207 = vld [vmem:[#allocation5 + $0x298] sm:$0xff]
    %v208 = vld [vmem:[#allocation5 + $0x2a0] sm:$0xff]
    %v209 = vld [vmem:[#allocation5 + $0x2a8] sm:$0xff]
    %v210 = vld [vmem:[#allocation5 + $0x2b0] sm:$0xff]
    %v211 = vld [vmem:[#allocation5 + $0x2b8] sm:$0xff]
    %v212 = vld [vmem:[#allocation5 + $0x2c0] sm:$0xff]
    %v213 = vld [vmem:[#allocation5 + $0x2c8] sm:$0xff]
    %v214 = vld [vmem:[#allocation5 + $0x2d0] sm:$0xff]
    %v215 = vld [vmem:[#allocation5 + $0x2d8] sm:$0xff]
    %v216 = vld [vmem:[#allocation5 + $0x2e0] sm:$0xff]
    %v217 = vld [vmem:[#allocation5 + $0x2e8] sm:$0xff]
    %v218 = vld [vmem:[#allocation5 + $0x2f0] sm:$0xff]
    %v219 = vld [vmem:[#allocation5 + $0x2f8] sm:$0xff]
    %v220 = vld [vmem:[#allocation5 + $0x300] sm:$0xff]
    %v221 = vld [vmem:[#allocation5 + $0x308] sm:$0xff]
    %v222 = vld [vmem:[#allocation5 + $0x310] sm:$0xff]
    %v223 = vld [vmem:[#allocation5 + $0x318] sm:$0xff]
    %v224 = vld [vmem:[#allocation5 + $0x320] sm:$0xff]
    %v225 = vld [vmem:[#allocation5 + $0x328] sm:$0xff]
    %v226 = vld [vmem:[#allocation5 + $0x330] sm:$0xff]
    %v227 = vld [vmem:[#allocation5 + $0x338] sm:$0xff]
    %v228 = vld [vmem:[#allocation5 + $0x340] sm:$0xff]
    %v229 = vld [vmem:[#allocation5 + $0x348] sm:$0xff]
    %v230 = vld [vmem:[#allocation5 + $0x350] sm:$0xff]
    %v231 = vld [vmem:[#allocation5 + $0x358] sm:$0xff]
    %v232 = vld [vmem:[#allocation5 + $0x360] sm:$0xff]
    %v233 = vld [vmem:[#allocation5 + $0x368] sm:$0xff]
    %v234 = vld [vmem:[#allocation5 + $0x370] sm:$0xff]
    %v235 = vld [vmem:[#allocation5 + $0x378] sm:$0xff]
    %v236 = vld [vmem:[#allocation5 + $0x380] sm:$0xff]
    %v237 = vld [vmem:[#allocation5 + $0x388] sm:$0xff]
    %v238 = vld [vmem:[#allocation5 + $0x390] sm:$0xff]
    %v239 = vld [vmem:[#allocation5 + $0x398] sm:$0xff]
    %v240 = vld [vmem:[#allocation5 + $0x3a0] sm:$0xff]
    %v241 = vld [vmem:[#allocation5 + $0x3a8] sm:$0xff]
    %v242 = vld [vmem:[#allocation5 + $0x3b0] sm:$0xff]
    %v243 = vld [vmem:[#allocation5 + $0x3b8] sm:$0xff]
    %v244 = vld [vmem:[#allocation5 + $0x3c0] sm:$0xff]
    %v245 = vld [vmem:[#allocation5 + $0x3c8] sm:$0xff]
    %v246 = vld [vmem:[#allocation5 + $0x3d0] sm:$0xff]
    %v247 = vld [vmem:[#allocation5 + $0x3d8] sm:$0xff]
    %v248 = vld [vmem:[#allocation5 + $0x3e0] sm:$0xff]
    %v249 = vld [vmem:[#allocation5 + $0x3e8] sm:$0xff]
    %v250 = vld [vmem:[#allocation5 + $0x3f0] sm:$0xff]
    %v251 = vld [vmem:[#allocation5 + $0x3f8] sm:$0xff]
    %v252 = vld [vmem:[#allocation5 + $0x400] sm:$0xff]
    %v253 = vld [vmem:[#allocation5 + $0x408] sm:$0xff]
    %v254 = vld [vmem:[#allocation5 + $0x410] sm:$0xff]
    %v255 = vld [vmem:[#allocation5 + $0x418] sm:$0xff]
    %v256 = vld [vmem:[#allocation5 + $0x420] sm:$0xff]
    %v257 = vld [vmem:[#allocation5 + $0x428] sm:$0xff]
    %v258 = vld [vmem:[#allocation5 + $0x430] sm:$0xff]
    %v259 = vld [vmem:[#allocation5 + $0x438] sm:$0xff]
    %v260 = vld [vmem:[#allocation5 + $0x440] sm:$0xff]
    %v261 = vld [vmem:[#allocation5 + $0x448] sm:$0xff]
    %v262 = vld [vmem:[#allocation5 + $0x450] sm:$0xff]
    %v263 = vld [vmem:[#allocation5 + $0x458] sm:$0xff]
    %v264 = vld [vmem:[#allocation5 + $0x460] sm:$0xff]
    %v265 = vld [vmem:[#allocation5 + $0x468] sm:$0xff]
    %v266 = vld [vmem:[#allocation5 + $0x470] sm:$0xff]
    %v267 = vld [vmem:[#allocation5 + $0x478] sm:$0xff]
    %v268 = vld [vmem:[%s2] sm:$0xff]
    %v269 = vld [vmem:[%s2 + $0x8] sm:$0xff]
    %v270 = vld [vmem:[%s2 + $0x10] sm:$0xff]
    %v271 = vld [vmem:[%s2 + $0x18] sm:$0xff]
    %v272 = vld [vmem:[%s2 + $0x20] sm:$0xff]
    %v273 = vld [vmem:[%s2 + $0x28] sm:$0xff]
    %v274 = vld [vmem:[%s2 + $0x30] sm:$0xff]
    %v275 = vld [vmem:[%s2 + $0x38] sm:$0xff]
    %v276 = vld [vmem:[%s2 + $0x40] sm:$0xff]
    %v277 = vld [vmem:[%s2 + $0x48] sm:$0xff]
    %v278 = vld [vmem:[%s2 + $0x50] sm:$0xff]
    %v279 = vld [vmem:[%s2 + $0x58] sm:$0xff]
    %v280 = vld [vmem:[%s2 + $0x60] sm:$0xff]
    %v281 = vld [vmem:[%s2 + $0x68] sm:$0xff]
    %v282 = vld [vmem:[%s2 + $0x70] sm:$0xff]
    %v283 = vld [vmem:[%s2 + $0x78] sm:$0xff]
    %v284 = vld [vmem:[%s2 + $0x80] sm:$0xff]
    %v285 = vld [vmem:[%s2 + $0x88] sm:$0xff]
    %v286 = vld [vmem:[%s2 + $0x90] sm:$0xff]
    %v287 = vld [vmem:[%s2 + $0x98] sm:$0xff]
    %v288 = vld [vmem:[%s2 + $0xa0] sm:$0xff]
    %v289 = vld [vmem:[%s2 + $0xa8] sm:$0xff]
    %v290 = vld [vmem:[%s2 + $0xb0] sm:$0xff]
    %v291 = vld [vmem:[%s2 + $0xb8] sm:$0xff]
    %v292 = vld [vmem:[%s2 + $0xc0] sm:$0xff]
    %v293 = vld [vmem:[%s2 + $0xc8] sm:$0xff]
    %v294 = vld [vmem:[%s2 + $0xd0] sm:$0xff]
    %v295 = vld [vmem:[%s2 + $0xd8] sm:$0xff]
    %v296 = vld [vmem:[%s2 + $0xe0] sm:$0xff]
    %v297 = vld [vmem:[%s2 + $0xe8] sm:$0xff]
    %v298 = vld [vmem:[%s2 + $0xf0] sm:$0xff]
    %v299 = vld [vmem:[%s2 + $0xf8] sm:$0xff]
    %v300 = vld [vmem:[%s2 + $0x100] sm:$0xff]
    %v301 = vld [vmem:[%s2 + $0x108] sm:$0xff]
    %v302 = vld [vmem:[%s2 + $0x110] sm:$0xff]
    %v303 = vld [vmem:[%s2 + $0x118] sm:$0xff]
    %v304 = vld [vmem:[%s2 + $0x120] sm:$0xff]
    %v305 = vld [vmem:[%s2 + $0x128] sm:$0xff]
    %v306 = vld [vmem:[%s2 + $0x130] sm:$0xff]
    %v307 = vld [vmem:[%s2 + $0x138] sm:$0xff]
    %v308 = vld [vmem:[%s2 + $0x140] sm:$0xff]
    %v309 = vld [vmem:[%s2 + $0x148] sm:$0xff]
    %v310 = vld [vmem:[%s2 + $0x150] sm:$0xff]
    %v311 = vld [vmem:[%s2 + $0x158] sm:$0xff]
    %v312 = vld [vmem:[%s2 + $0x160] sm:$0xff]
    %v313 = vld [vmem:[%s2 + $0x168] sm:$0xff]
    %v314 = vld [vmem:[%s2 + $0x170] sm:$0xff]
    %v315 = vld [vmem:[%s2 + $0x178] sm:$0xff]
    %317 = vset.pattern.permute.xlu0 0
    %318 = vperm.xlu0 %317, %v268
    %v319 = vpop.permute.xlu0 %318
    %322 = vset.pattern.permute.xlu0 0
    %323 = vperm.xlu0 %322, %v269
    %v324 = vpop.permute.xlu0 %323
    %327 = vset.pattern.permute.xlu0 0
    %328 = vperm.xlu0 %327, %v270
    %v329 = vpop.permute.xlu0 %328
    %332 = vset.pattern.permute.xlu0 0
    %333 = vperm.xlu0 %332, %v271
    %v334 = vpop.permute.xlu0 %333
    %337 = vset.pattern.permute.xlu0 0
    %338 = vperm.xlu0 %337, %v272
    %v339 = vpop.permute.xlu0 %338
    %342 = vset.pattern.permute.xlu0 0
    %343 = vperm.xlu0 %342, %v273
    %v344 = vpop.permute.xlu0 %343
    %347 = vset.pattern.permute.xlu0 0
    %348 = vperm.xlu0 %347, %v274
    %v349 = vpop.permute.xlu0 %348
    %352 = vset.pattern.permute.xlu0 0
    %353 = vperm.xlu0 %352, %v275
    %v354 = vpop.permute.xlu0 %353
    %357 = vset.pattern.permute.xlu0 0
    %358 = vperm.xlu0 %357, %v276
    %v359 = vpop.permute.xlu0 %358
    %362 = vset.pattern.permute.xlu0 0
    %363 = vperm.xlu0 %362, %v277
    %v364 = vpop.permute.xlu0 %363
    %367 = vset.pattern.permute.xlu0 0
    %368 = vperm.xlu0 %367, %v278
    %v369 = vpop.permute.xlu0 %368
    %372 = vset.pattern.permute.xlu0 0
    %373 = vperm.xlu0 %372, %v279
    %v374 = vpop.permute.xlu0 %373
    %377 = vset.pattern.permute.xlu0 0
    %378 = vperm.xlu0 %377, %v280
    %v379 = vpop.permute.xlu0 %378
    %382 = vset.pattern.permute.xlu0 0
    %383 = vperm.xlu0 %382, %v281
    %v384 = vpop.permute.xlu0 %383
    %387 = vset.pattern.permute.xlu0 0
    %388 = vperm.xlu0 %387, %v282
    %v389 = vpop.permute.xlu0 %388
    %392 = vset.pattern.permute.xlu0 0
    %393 = vperm.xlu0 %392, %v283
    %v394 = vpop.permute.xlu0 %393
    %397 = vset.pattern.permute.xlu0 0
    %398 = vperm.xlu0 %397, %v284
    %v399 = vpop.permute.xlu0 %398
    %402 = vset.pattern.permute.xlu0 0
    %403 = vperm.xlu0 %402, %v285
    %v404 = vpop.permute.xlu0 %403
    %407 = vset.pattern.permute.xlu0 0
    %408 = vperm.xlu0 %407, %v286
    %v409 = vpop.permute.xlu0 %408
    %412 = vset.pattern.permute.xlu0 0
    %413 = vperm.xlu0 %412, %v287
    %v414 = vpop.permute.xlu0 %413
    %417 = vset.pattern.permute.xlu0 0
    %418 = vperm.xlu0 %417, %v288
    %v419 = vpop.permute.xlu0 %418
    %422 = vset.pattern.permute.xlu0 0
    %423 = vperm.xlu0 %422, %v289
    %v424 = vpop.permute.xlu0 %423
    %427 = vset.pattern.permute.xlu0 0
    %428 = vperm.xlu0 %427, %v290
    %v429 = vpop.permute.xlu0 %428
    %432 = vset.pattern.permute.xlu0 0
    %433 = vperm.xlu0 %432, %v291
    %v434 = vpop.permute.xlu0 %433
    %437 = vset.pattern.permute.xlu0 0
    %438 = vperm.xlu0 %437, %v292
    %v439 = vpop.permute.xlu0 %438
    %442 = vset.pattern.permute.xlu0 0
    %443 = vperm.xlu0 %442, %v293
    %v444 = vpop.permute.xlu0 %443
    %447 = vset.pattern.permute.xlu0 0
    %448 = vperm.xlu0 %447, %v294
    %v449 = vpop.permute.xlu0 %448
    %452 = vset.pattern.permute.xlu0 0
    %453 = vperm.xlu0 %452, %v295
    %v454 = vpop.permute.xlu0 %453
    %457 = vset.pattern.permute.xlu0 0
    %458 = vperm.xlu0 %457, %v296
    %v459 = vpop.permute.xlu0 %458
    %462 = vset.pattern.permute.xlu0 0
    %463 = vperm.xlu0 %462, %v297
    %v464 = vpop.permute.xlu0 %463
    %467 = vset.pattern.permute.xlu0 0
    %468 = vperm.xlu0 %467, %v298
    %v469 = vpop.permute.xlu0 %468
    %472 = vset.pattern.permute.xlu0 0
    %473 = vperm.xlu0 %472, %v299
    %v474 = vpop.permute.xlu0 %473
    %477 = vset.pattern.permute.xlu0 0
    %478 = vperm.xlu0 %477, %v300
    %v479 = vpop.permute.xlu0 %478
    %482 = vset.pattern.permute.xlu0 0
    %483 = vperm.xlu0 %482, %v301
    %v484 = vpop.permute.xlu0 %483
    %487 = vset.pattern.permute.xlu0 0
    %488 = vperm.xlu0 %487, %v302
    %v489 = vpop.permute.xlu0 %488
    %492 = vset.pattern.permute.xlu0 0
    %493 = vperm.xlu0 %492, %v303
    %v494 = vpop.permute.xlu0 %493
    %497 = vset.pattern.permute.xlu0 0
    %498 = vperm.xlu0 %497, %v304
    %v499 = vpop.permute.xlu0 %498
    %502 = vset.pattern.permute.xlu0 0
    %503 = vperm.xlu0 %502, %v305
    %v504 = vpop.permute.xlu0 %503
    %507 = vset.pattern.permute.xlu0 0
    %508 = vperm.xlu0 %507, %v306
    %v509 = vpop.permute.xlu0 %508
    %512 = vset.pattern.permute.xlu0 0
    %513 = vperm.xlu0 %512, %v307
    %v514 = vpop.permute.xlu0 %513
    %517 = vset.pattern.permute.xlu0 0
    %518 = vperm.xlu0 %517, %v308
    %v519 = vpop.permute.xlu0 %518
    %522 = vset.pattern.permute.xlu0 0
    %523 = vperm.xlu0 %522, %v309
    %v524 = vpop.permute.xlu0 %523
    %527 = vset.pattern.permute.xlu0 0
    %528 = vperm.xlu0 %527, %v310
    %v529 = vpop.permute.xlu0 %528
    %532 = vset.pattern.permute.xlu0 0
    %533 = vperm.xlu0 %532, %v311
    %v534 = vpop.permute.xlu0 %533
    %537 = vset.pattern.permute.xlu0 0
    %538 = vperm.xlu0 %537, %v312
    %v539 = vpop.permute.xlu0 %538
    %542 = vset.pattern.permute.xlu0 0
    %543 = vperm.xlu0 %542, %v313
    %v544 = vpop.permute.xlu0 %543
    %547 = vset.pattern.permute.xlu0 0
    %548 = vperm.xlu0 %547, %v314
    %v549 = vpop.permute.xlu0 %548
    %552 = vset.pattern.permute.xlu0 0
    %553 = vperm.xlu0 %552, %v315
    %v554 = vpop.permute.xlu0 %553
    %556 = vmatprep.subr.mxu0 %v50
    %557 = vmatpush1.xpose.msra.mxu0 %v49
    %558 = vmatprep.subr.mxu0 %v53
    %559 = vmatpush1.xpose.msra.mxu0 %v52
    %560 = vmatprep.subr.mxu0 %v56
    %561 = vmatpush1.xpose.msra.mxu0 %v55
    %562 = vmatprep.subr.mxu0 %v59
    %563 = vmatpush1.xpose.msra.mxu0 %v58
    %564 = vmatprep.subr.mxu0 %v62
    %565 = vmatpush1.xpose.msra.mxu0 %v61
    %566 = vmatprep.subr.mxu0 %v65
    %567 = vmatpush1.xpose.msra.mxu0 %v64
    %568 = vmatprep.subr.mxu0 %v68
    %569 = vmatpush1.xpose.msra.mxu0 %v67
    %570 = vmatprep.subr.mxu0 %v71
    %571 = vmatpush1.xpose.msra.mxu0 %v70
    %572 = vmatprep.subr.mxu0 %v74
    %573 = vmatpush1.xpose.msra.mxu0 %v73
    %574 = vmatprep.subr.mxu0 %v77
    %575 = vmatpush1.xpose.msra.mxu0 %v76
    %576 = vmatprep.subr.mxu0 %v80
    %577 = vmatpush1.xpose.msra.mxu0 %v79
    %578 = vmatprep.subr.mxu0 %v83
    %579 = vmatpush1.xpose.msra.mxu0 %v82
    %580 = vmatprep.subr.mxu0 %v86
    %581 = vmatpush1.xpose.msra.mxu0 %v85
    %582 = vmatprep.subr.mxu0 %v89
    %583 = vmatpush1.xpose.msra.mxu0 %v88
    %584 = vmatprep.subr.mxu0 %v92
    %585 = vmatpush1.xpose.msra.mxu0 %v91
    %586 = vmatprep.subr.mxu0 %v95
    %587 = vmatpush1.xpose.msra.mxu0 %v94
    %588 = vmatprep.subr.mxu0 %v98
    %589 = vmatpush1.xpose.msra.mxu0 %v97
    %590 = vmatprep.subr.mxu0 %v101
    %591 = vmatpush1.xpose.msra.mxu0 %v100
    %592 = vmatprep.subr.mxu0 %v104
    %593 = vmatpush1.xpose.msra.mxu0 %v103
    %594 = vmatprep.subr.mxu0 %v107
    %595 = vmatpush1.xpose.msra.mxu0 %v106
    %596 = vmatprep.subr.mxu0 %v110
    %597 = vmatpush1.xpose.msra.mxu0 %v109
    %598 = vmatprep.subr.mxu0 %v113
    %599 = vmatpush1.xpose.msra.mxu0 %v112
    %600 = vmatprep.subr.mxu0 %v116
    %601 = vmatpush1.xpose.msra.mxu0 %v115
    %602 = vmatprep.subr.mxu0 %v119
    %603 = vmatpush1.xpose.msra.mxu0 %v118
    %604 = vmatprep.subr.mxu0 %v122
    %605 = vmatpush1.xpose.msra.mxu0 %v121
    %606 = vmatprep.subr.mxu0 0.0
    %607 = vmatpush1.xpose.msra.mxu0 0.0
    %608 = vmatprep.subr.mxu0 0.0
    %609 = vmatpush1.xpose.msra.mxu0 0.0
    %610 = vmatprep.subr.mxu0 0.0
    %611 = vmatpush1.xpose.msra.mxu0 0.0
    %612 = vmatprep.subr.mxu0 0.0
    %613 = vmatpush1.xpose.msra.mxu0 0.0
    %614 = vmatprep.subr.mxu0 0.0
    %615 = vmatpush1.xpose.msra.mxu0 0.0
    %616 = vmatprep.subr.mxu0 0.0
    %617 = vmatpush1.xpose.msra.mxu0 0.0
    %618 = vmatprep.subr.mxu0 0.0
    %619 = vmatpush1.xpose.msra.mxu0 0.0
    %620 = vmatprep.mubr.f32.mxu0 %v125
    %621 = vmatmul.mubr.f32.gmra.mrb[0].mxu0 %v124
    %v622 = vpop.f32.mrb[0].mxu0
    %v623 = vadd.f32 %v319, %v622
    %v624 = vpop.f32.mrb[0].mxu0
    %v625 = vadd.f32 %v319, %v624
    %626 = vmatprep.mubr.f32.mxu0 %v128
    %627 = vmatmul.mubr.f32.gmra.mrb[0].mxu0 %v127
    %v628 = vpop.f32.mrb[0].mxu0
    %v629 = vadd.f32 %v324, %v628
    %v630 = vpop.f32.mrb[0].mxu0
    %v631 = vadd.f32 %v324, %v630
    %632 = vmatprep.mubr.f32.mxu0 %v131
    %633 = vmatmul.mubr.f32.gmra.mrb[0].mxu0 %v130
    %v634 = vpop.f32.mrb[0].mxu0
    %v635 = vadd.f32 %v329, %v634
    %v636 = vpop.f32.mrb[0].mxu0
    %v637 = vadd.f32 %v329, %v636
    %638 = vmatprep.mubr.f32.mxu0 %v134
    %639 = vmatmul.mubr.f32.gmra.mrb[0].mxu0 %v133
    %v640 = vpop.f32.mrb[0].mxu0
    %v641 = vadd.f32 %v334, %v640
    %v642 = vpop.f32.mrb[0].mxu0
    %v643 = vadd.f32 %v334, %v642
    %644 = vmatprep.mubr.f32.mxu0 %v137
    %645 = vmatmul.mubr.f32.gmra.mrb[0].mxu0 %v136
    %v646 = vpop.f32.mrb[0].mxu0
    %v647 = vadd.f32 %v339, %v646
    %v648 = vpop.f32.mrb[0].mxu0
    %v649 = vadd.f32 %v339, %v648
    %650 = vmatprep.mubr.f32.mxu0 %v140
    %651 = vmatmul.mubr.f32.gmra.mrb[0].mxu0 %v139
    %v652 = vpop.f32.mrb[0].mxu0
    %v653 = vadd.f32 %v344, %v652
    %v654 = vpop.f32.mrb[0].mxu0
    %v655 = vadd.f32 %v344, %v654
    %656 = vmatprep.mubr.f32.mxu0 %v143
    %657 = vmatmul.mubr.f32.gmra.mrb[0].mxu0 %v142
    %v658 = vpop.f32.mrb[0].mxu0
    %v659 = vadd.f32 %v349, %v658
    %v660 = vpop.f32.mrb[0].mxu0
    %v661 = vadd.f32 %v349, %v660
    %662 = vmatprep.mubr.f32.mxu0 %v146
    %663 = vmatmul.mubr.f32.gmra.mrb[0].mxu0 %v145
    %v664 = vpop.f32.mrb[0].mxu0
    %v665 = vadd.f32 %v354, %v664
    %v666 = vpop.f32.mrb[0].mxu0
    %v667 = vadd.f32 %v354, %v666
    %668 = vmatprep.mubr.f32.mxu0 %v149
    %669 = vmatmul.mubr.f32.gmra.mrb[0].mxu0 %v148
    %v670 = vpop.f32.mrb[0].mxu0
    %v671 = vadd.f32 %v359, %v670
    %v672 = vpop.f32.mrb[0].mxu0
    %v673 = vadd.f32 %v359, %v672
    %674 = vmatprep.mubr.f32.mxu0 %v152
    %675 = vmatmul.mubr.f32.gmra.mrb[0].mxu0 %v151
    %v676 = vpop.f32.mrb[0].mxu0
    %v677 = vadd.f32 %v364, %v676
    %v678 = vpop.f32.mrb[0].mxu0
    %v679 = vadd.f32 %v364, %v678
    %680 = vmatprep.mubr.f32.mxu0 %v155
    %681 = vmatmul.mubr.f32.gmra.mrb[0].mxu0 %v154
    %v682 = vpop.f32.mrb[0].mxu0
    %v683 = vadd.f32 %v369, %v682
    %v684 = vpop.f32.mrb[0].mxu0
    %v685 = vadd.f32 %v369, %v684
    %686 = vmatprep.mubr.f32.mxu0 %v158
    %687 = vmatmul.mubr.f32.gmra.mrb[0].mxu0 %v157
    %v688 = vpop.f32.mrb[0].mxu0
    %v689 = vadd.f32 %v374, %v688
    %v690 = vpop.f32.mrb[0].mxu0
    %v691 = vadd.f32 %v374, %v690
    %692 = vmatprep.mubr.f32.mxu0 %v161
    %693 = vmatmul.mubr.f32.gmra.mrb[0].mxu0 %v160
    %v694 = vpop.f32.mrb[0].mxu0
    %v695 = vadd.f32 %v379, %v694
    %v696 = vpop.f32.mrb[0].mxu0
    %v697 = vadd.f32 %v379, %v696
    %698 = vmatprep.mubr.f32.mxu0 %v164
    %699 = vmatmul.mubr.f32.gmra.mrb[0].mxu0 %v163
    %v700 = vpop.f32.mrb[0].mxu0
    %v701 = vadd.f32 %v384, %v700
    %v702 = vpop.f32.mrb[0].mxu0
    %v703 = vadd.f32 %v384, %v702
    %704 = vmatprep.mubr.f32.mxu0 %v167
    %705 = vmatmul.mubr.f32.gmra.mrb[0].mxu0 %v166
    %v706 = vpop.f32.mrb[0].mxu0
    %v707 = vadd.f32 %v389, %v706
    %v708 = vpop.f32.mrb[0].mxu0
    %v709 = vadd.f32 %v389, %v708
    %710 = vmatprep.mubr.f32.mxu0 %v170
    %711 = vmatmul.mubr.f32.gmra.mrb[0].mxu0 %v169
    %v712 = vpop.f32.mrb[0].mxu0
    %v713 = vadd.f32 %v394, %v712
    %v714 = vpop.f32.mrb[0].mxu0
    %v715 = vadd.f32 %v394, %v714
    %716 = vmatprep.mubr.f32.mxu0 %v173
    %717 = vmatmul.mubr.f32.gmra.mrb[0].mxu0 %v172
    %v718 = vpop.f32.mrb[0].mxu0
    %v719 = vadd.f32 %v399, %v718
    %v720 = vpop.f32.mrb[0].mxu0
    %v721 = vadd.f32 %v399, %v720
    %722 = vmatprep.mubr.f32.mxu0 %v176
    %723 = vmatmul.mubr.f32.gmra.mrb[0].mxu0 %v175
    %v724 = vpop.f32.mrb[0].mxu0
    %v725 = vadd.f32 %v404, %v724
    %v726 = vpop.f32.mrb[0].mxu0
    %v727 = vadd.f32 %v404, %v726
    %728 = vmatprep.mubr.f32.mxu0 %v179
    %729 = vmatmul.mubr.f32.gmra.mrb[0].mxu0 %v178
    %v730 = vpop.f32.mrb[0].mxu0
    %v731 = vadd.f32 %v409, %v730
    %v732 = vpop.f32.mrb[0].mxu0
    %v733 = vadd.f32 %v409, %v732
    %734 = vmatprep.mubr.f32.mxu0 %v182
    %735 = vmatmul.mubr.f32.gmra.mrb[0].mxu0 %v181
    %v736 = vpop.f32.mrb[0].mxu0
    %v737 = vadd.f32 %v414, %v736
    %v738 = vpop.f32.mrb[0].mxu0
    %v739 = vadd.f32 %v414, %v738
    %740 = vmatprep.mubr.f32.mxu0 %v185
    %741 = vmatmul.mubr.f32.gmra.mrb[0].mxu0 %v184
    %v742 = vpop.f32.mrb[0].mxu0
    %v743 = vadd.f32 %v419, %v742
    %v744 = vpop.f32.mrb[0].mxu0
    %v745 = vadd.f32 %v419, %v744
    %746 = vmatprep.mubr.f32.mxu0 %v188
    %747 = vmatmul.mubr.f32.gmra.mrb[0].mxu0 %v187
    %v748 = vpop.f32.mrb[0].mxu0
    %v749 = vadd.f32 %v424, %v748
    %v750 = vpop.f32.mrb[0].mxu0
    %v751 = vadd.f32 %v424, %v750
    %752 = vmatprep.mubr.f32.mxu0 %v191
    %753 = vmatmul.mubr.f32.gmra.mrb[0].mxu0 %v190
    %v754 = vpop.f32.mrb[0].mxu0
    %v755 = vadd.f32 %v429, %v754
    %v756 = vpop.f32.mrb[0].mxu0
    %v757 = vadd.f32 %v429, %v756
    %758 = vmatprep.mubr.f32.mxu0 %v194
    %759 = vmatmul.mubr.f32.gmra.mrb[0].mxu0 %v193
    %v760 = vpop.f32.mrb[0].mxu0
    %v761 = vadd.f32 %v434, %v760
    %v762 = vpop.f32.mrb[0].mxu0
    %v763 = vadd.f32 %v434, %v762
    %764 = vmatprep.mubr.f32.mxu0 %v197
    %765 = vmatmul.mubr.f32.gmra.mrb[0].mxu0 %v196
    %v766 = vpop.f32.mrb[0].mxu0
    %v767 = vadd.f32 %v439, %v766
    %v768 = vpop.f32.mrb[0].mxu0
    %v769 = vadd.f32 %v439, %v768
    %770 = vmatprep.mubr.f32.mxu0 %v200
    %771 = vmatmul.mubr.f32.gmra.mrb[0].mxu0 %v199
    %v772 = vpop.f32.mrb[0].mxu0
    %v773 = vadd.f32 %v444, %v772
    %v774 = vpop.f32.mrb[0].mxu0
    %v775 = vadd.f32 %v444, %v774
    %776 = vmatprep.mubr.f32.mxu0 %v203
    %777 = vmatmul.mubr.f32.gmra.mrb[0].mxu0 %v202
    %v778 = vpop.f32.mrb[0].mxu0
    %v779 = vadd.f32 %v449, %v778
    %v780 = vpop.f32.mrb[0].mxu0
    %v781 = vadd.f32 %v449, %v780
    %782 = vmatprep.mubr.f32.mxu0 %v206
    %783 = vmatmul.mubr.f32.gmra.mrb[0].mxu0 %v205
    %v784 = vpop.f32.mrb[0].mxu0
    %v785 = vadd.f32 %v454, %v784
    %v786 = vpop.f32.mrb[0].mxu0
    %v787 = vadd.f32 %v454, %v786
    %788 = vmatprep.mubr.f32.mxu0 %v209
    %789 = vmatmul.mubr.f32.gmra.mrb[0].mxu0 %v208
    %v790 = vpop.f32.mrb[0].mxu0
    %v791 = vadd.f32 %v459, %v790
    %v792 = vpop.f32.mrb[0].mxu0
    %v793 = vadd.f32 %v459, %v792
    %794 = vmatprep.mubr.f32.mxu0 %v212
    %795 = vmatmul.mubr.f32.gmra.mrb[0].mxu0 %v211
    %v796 = vpop.f32.mrb[0].mxu0
    %v797 = vadd.f32 %v464, %v796
    %v798 = vpop.f32.mrb[0].mxu0
    %v799 = vadd.f32 %v464, %v798
    %800 = vmatprep.mubr.f32.mxu0 %v215
    %801 = vmatmul.mubr.f32.gmra.mrb[0].mxu0 %v214
    %v802 = vpop.f32.mrb[0].mxu0
    %v803 = vadd.f32 %v469, %v802
    %v804 = vpop.f32.mrb[0].mxu0
    %v805 = vadd.f32 %v469, %v804
    %806 = vmatprep.mubr.f32.mxu0 %v218
    %807 = vmatmul.mubr.f32.gmra.mrb[0].mxu0 %v217
    %v808 = vpop.f32.mrb[0].mxu0
    %v809 = vadd.f32 %v474, %v808
    %v810 = vpop.f32.mrb[0].mxu0
    %v811 = vadd.f32 %v474, %v810
    %812 = vmatprep.mubr.f32.mxu0 %v221
    %813 = vmatmul.mubr.f32.gmra.mrb[0].mxu0 %v220
    %v814 = vpop.f32.mrb[0].mxu0
    %v815 = vadd.f32 %v479, %v814
    %v816 = vpop.f32.mrb[0].mxu0
    %v817 = vadd.f32 %v479, %v816
    %818 = vmatprep.mubr.f32.mxu0 %v224
    %819 = vmatmul.mubr.f32.gmra.mrb[0].mxu0 %v223
    %v820 = vpop.f32.mrb[0].mxu0
    %v821 = vadd.f32 %v484, %v820
    %v822 = vpop.f32.mrb[0].mxu0
    %v823 = vadd.f32 %v484, %v822
    %824 = vmatprep.mubr.f32.mxu0 %v227
    %825 = vmatmul.mubr.f32.gmra.mrb[0].mxu0 %v226
    %v826 = vpop.f32.mrb[0].mxu0
    %v827 = vadd.f32 %v489, %v826
    %v828 = vpop.f32.mrb[0].mxu0
    %v829 = vadd.f32 %v489, %v828
    %830 = vmatprep.mubr.f32.mxu0 %v230
    %831 = vmatmul.mubr.f32.gmra.mrb[0].mxu0 %v229
    %v832 = vpop.f32.mrb[0].mxu0
    %v833 = vadd.f32 %v494, %v832
    %v834 = vpop.f32.mrb[0].mxu0
    %v835 = vadd.f32 %v494, %v834
    %836 = vmatprep.mubr.f32.mxu0 %v233
    %837 = vmatmul.mubr.f32.gmra.mrb[0].mxu0 %v232
    %v838 = vpop.f32.mrb[0].mxu0
    %v839 = vadd.f32 %v499, %v838
    %v840 = vpop.f32.mrb[0].mxu0
    %v841 = vadd.f32 %v499, %v840
    %842 = vmatprep.mubr.f32.mxu0 %v236
    %843 = vmatmul.mubr.f32.gmra.mrb[0].mxu0 %v235
    %v844 = vpop.f32.mrb[0].mxu0
    %v845 = vadd.f32 %v504, %v844
    %v846 = vpop.f32.mrb[0].mxu0
    %v847 = vadd.f32 %v504, %v846
    %848 = vmatprep.mubr.f32.mxu0 %v239
    %849 = vmatmul.mubr.f32.gmra.mrb[0].mxu0 %v238
    %v850 = vpop.f32.mrb[0].mxu0
    %v851 = vadd.f32 %v509, %v850
    %v852 = vpop.f32.mrb[0].mxu0
    %v853 = vadd.f32 %v509, %v852
    %854 = vmatprep.mubr.f32.mxu0 %v242
    %855 = vmatmul.mubr.f32.gmra.mrb[0].mxu0 %v241
    %v856 = vpop.f32.mrb[0].mxu0
    %v857 = vadd.f32 %v514, %v856
    %v858 = vpop.f32.mrb[0].mxu0
    %v859 = vadd.f32 %v514, %v858
    %860 = vmatprep.mubr.f32.mxu0 %v245
    %861 = vmatmul.mubr.f32.gmra.mrb[0].mxu0 %v244
    %v862 = vpop.f32.mrb[0].mxu0
    %v863 = vadd.f32 %v519, %v862
    %v864 = vpop.f32.mrb[0].mxu0
    %v865 = vadd.f32 %v519, %v864
    %866 = vmatprep.mubr.f32.mxu0 %v248
    %867 = vmatmul.mubr.f32.gmra.mrb[0].mxu0 %v247
    %v868 = vpop.f32.mrb[0].mxu0
    %v869 = vadd.f32 %v524, %v868
    %v870 = vpop.f32.mrb[0].mxu0
    %v871 = vadd.f32 %v524, %v870
    %872 = vmatprep.mubr.f32.mxu0 %v251
    %873 = vmatmul.mubr.f32.gmra.mrb[0].mxu0 %v250
    %v874 = vpop.f32.mrb[0].mxu0
    %v875 = vadd.f32 %v529, %v874
    %v876 = vpop.f32.mrb[0].mxu0
    %v877 = vadd.f32 %v529, %v876
    %878 = vmatprep.mubr.f32.mxu0 %v254
    %879 = vmatmul.mubr.f32.gmra.mrb[0].mxu0 %v253
    %v880 = vpop.f32.mrb[0].mxu0
    %v881 = vadd.f32 %v534, %v880
    %v882 = vpop.f32.mrb[0].mxu0
    %v883 = vadd.f32 %v534, %v882
    %884 = vmatprep.mubr.f32.mxu0 %v257
    %885 = vmatmul.mubr.f32.gmra.mrb[0].mxu0 %v256
    %v886 = vpop.f32.mrb[0].mxu0
    %v887 = vadd.f32 %v539, %v886
    %v888 = vpop.f32.mrb[0].mxu0
    %v889 = vadd.f32 %v539, %v888
    %890 = vmatprep.mubr.f32.mxu0 %v260
    %891 = vmatmul.mubr.f32.gmra.mrb[0].mxu0 %v259
    %v892 = vpop.f32.mrb[0].mxu0
    %v893 = vadd.f32 %v544, %v892
    %v894 = vpop.f32.mrb[0].mxu0
    %v895 = vadd.f32 %v544, %v894
    %896 = vmatprep.mubr.f32.mxu0 %v263
    %897 = vmatmul.mubr.f32.gmra.mrb[0].mxu0 %v262
    %v898 = vpop.f32.mrb[0].mxu0
    %v899 = vadd.f32 %v549, %v898
    %v900 = vpop.f32.mrb[0].mxu0
    %v901 = vadd.f32 %v549, %v900
    %902 = vmatprep.mubr.f32.mxu0 %v266
    %903 = vmatmul.mubr.f32.gmra.mrb[0].mxu0 %v265
    %v904 = vpop.f32.mrb[0].mxu0
    %v905 = vadd.f32 %v554, %v904
    %v906 = vpop.f32.mrb[0].mxu0
    %v907 = vadd.f32 %v554, %v906
    %908 = vdwg.mxu0
    %909 = vmatprep.subr.mxu0 0.0
    %910 = vmatpush1.xpose.msra.mxu0 %v51
    %911 = vmatprep.subr.mxu0 0.0
    %912 = vmatpush1.xpose.msra.mxu0 %v54
    %913 = vmatprep.subr.mxu0 0.0
    %914 = vmatpush1.xpose.msra.mxu0 %v57
    %915 = vmatprep.subr.mxu0 0.0
    %916 = vmatpush1.xpose.msra.mxu0 %v60
    %917 = vmatprep.subr.mxu0 0.0
    %918 = vmatpush1.xpose.msra.mxu0 %v63
    %919 = vmatprep.subr.mxu0 0.0
    %920 = vmatpush1.xpose.msra.mxu0 %v66
    %921 = vmatprep.subr.mxu0 0.0
    %922 = vmatpush1.xpose.msra.mxu0 %v69
    %923 = vmatprep.subr.mxu0 0.0
    %924 = vmatpush1.xpose.msra.mxu0 %v72
    %925 = vmatprep.subr.mxu0 0.0
    %926 = vmatpush1.xpose.msra.mxu0 %v75
    %927 = vmatprep.subr.mxu0 0.0
    %928 = vmatpush1.xpose.msra.mxu0 %v78
    %929 = vmatprep.subr.mxu0 0.0
    %930 = vmatpush1.xpose.msra.mxu0 %v81
    %931 = vmatprep.subr.mxu0 0.0
    %932 = vmatpush1.xpose.msra.mxu0 %v84
    %933 = vmatprep.subr.mxu0 0.0
    %934 = vmatpush1.xpose.msra.mxu0 %v87
    %935 = vmatprep.subr.mxu0 0.0
    %936 = vmatpush1.xpose.msra.mxu0 %v90
    %937 = vmatprep.subr.mxu0 0.0
    %938 = vmatpush1.xpose.msra.mxu0 %v93
    %939 = vmatprep.subr.mxu0 0.0
    %940 = vmatpush1.xpose.msra.mxu0 %v96
    %941 = vmatprep.subr.mxu0 0.0
    %942 = vmatpush1.xpose.msra.mxu0 %v99
    %943 = vmatprep.subr.mxu0 0.0
    %944 = vmatpush1.xpose.msra.mxu0 %v102
    %945 = vmatprep.subr.mxu0 0.0
    %946 = vmatpush1.xpose.msra.mxu0 %v105
    %947 = vmatprep.subr.mxu0 0.0
    %948 = vmatpush1.xpose.msra.mxu0 %v108
    %949 = vmatprep.subr.mxu0 0.0
    %950 = vmatpush1.xpose.msra.mxu0 %v111
    %951 = vmatprep.subr.mxu0 0.0
    %952 = vmatpush1.xpose.msra.mxu0 %v114
    %953 = vmatprep.subr.mxu0 0.0
    %954 = vmatpush1.xpose.msra.mxu0 %v117
    %955 = vmatprep.subr.mxu0 0.0
    %956 = vmatpush1.xpose.msra.mxu0 %v120
    %957 = vmatprep.subr.mxu0 0.0
    %958 = vmatpush1.xpose.msra.mxu0 %v123
    %959 = vmatprep.subr.mxu0 0.0
    %960 = vmatpush1.xpose.msra.mxu0 0.0
    %961 = vmatprep.subr.mxu0 0.0
    %962 = vmatpush1.xpose.msra.mxu0 0.0
    %963 = vmatprep.subr.mxu0 0.0
    %964 = vmatpush1.xpose.msra.mxu0 0.0
    %965 = vmatprep.subr.mxu0 0.0
    %966 = vmatpush1.xpose.msra.mxu0 0.0
    %967 = vmatprep.subr.mxu0 0.0
    %968 = vmatpush1.xpose.msra.mxu0 0.0
    %969 = vmatprep.subr.mxu0 0.0
    %970 = vmatpush1.xpose.msra.mxu0 0.0
    %971 = vmatprep.subr.mxu0 0.0
    %972 = vmatpush1.xpose.msra.mxu0 0.0
    %973 = vmatprep.mubr.f32.mxu0 0.0
    %974 = vmatmul.mubr.f32.gmra.mrb[0].mxu0 %v126
    %v975 = vpop.f32.mrb[0].mxu0
    %v976 = vadd.f32 %v623, %v975
    %v977 = vpop.f32.mrb[0].mxu0
    %v978 = vadd.f32 %v625, %v977
    %979 = vmatprep.mubr.f32.mxu0 0.0
    %980 = vmatmul.mubr.f32.gmra.mrb[0].mxu0 %v129
    %v981 = vpop.f32.mrb[0].mxu0
    %v982 = vadd.f32 %v629, %v981
    %v983 = vpop.f32.mrb[0].mxu0
    %v984 = vadd.f32 %v631, %v983
    %985 = vmatprep.mubr.f32.mxu0 0.0
    %986 = vmatmul.mubr.f32.gmra.mrb[0].mxu0 %v132
    %v987 = vpop.f32.mrb[0].mxu0
    %v988 = vadd.f32 %v635, %v987
    %v989 = vpop.f32.mrb[0].mxu0
    %v990 = vadd.f32 %v637, %v989
    %991 = vmatprep.mubr.f32.mxu0 0.0
    %992 = vmatmul.mubr.f32.gmra.mrb[0].mxu0 %v135
    %v993 = vpop.f32.mrb[0].mxu0
    %v994 = vadd.f32 %v641, %v993
    %v995 = vpop.f32.mrb[0].mxu0
    %v996 = vadd.f32 %v643, %v995
    %997 = vmatprep.mubr.f32.mxu0 0.0
    %998 = vmatmul.mubr.f32.gmra.mrb[0].mxu0 %v138
    %v999 = vpop.f32.mrb[0].mxu0
    %v1000 = vadd.f32 %v647, %v999
    %v1001 = vpop.f32.mrb[0].mxu0
    %v1002 = vadd.f32 %v649, %v1001
    %1003 = vmatprep.mubr.f32.mxu0 0.0
    %1004 = vmatmul.mubr.f32.gmra.mrb[0].mxu0 %v141
    %v1005 = vpop.f32.mrb[0].mxu0
    %v1006 = vadd.f32 %v653, %v1005
    %v1007 = vpop.f32.mrb[0].mxu0
    %v1008 = vadd.f32 %v655, %v1007
    %1009 = vmatprep.mubr.f32.mxu0 0.0
    %1010 = vmatmul.mubr.f32.gmra.mrb[0].mxu0 %v144
    %v1011 = vpop.f32.mrb[0].mxu0
    %v1012 = vadd.f32 %v659, %v1011
    %v1013 = vpop.f32.mrb[0].mxu0
    %v1014 = vadd.f32 %v661, %v1013
    %1015 = vmatprep.mubr.f32.mxu0 0.0
    %1016 = vmatmul.mubr.f32.gmra.mrb[0].mxu0 %v147
    %v1017 = vpop.f32.mrb[0].mxu0
    %v1018 = vadd.f32 %v665, %v1017
    %v1019 = vpop.f32.mrb[0].mxu0
    %v1020 = vadd.f32 %v667, %v1019
    %1021 = vmatprep.mubr.f32.mxu0 0.0
    %1022 = vmatmul.mubr.f32.gmra.mrb[0].mxu0 %v150
    %v1023 = vpop.f32.mrb[0].mxu0
    %v1024 = vadd.f32 %v671, %v1023
    %v1025 = vpop.f32.mrb[0].mxu0
    %v1026 = vadd.f32 %v673, %v1025
    %1027 = vmatprep.mubr.f32.mxu0 0.0
    %1028 = vmatmul.mubr.f32.gmra.mrb[0].mxu0 %v153
    %v1029 = vpop.f32.mrb[0].mxu0
    %v1030 = vadd.f32 %v677, %v1029
    %v1031 = vpop.f32.mrb[0].mxu0
    %v1032 = vadd.f32 %v679, %v1031
    %1033 = vmatprep.mubr.f32.mxu0 0.0
    %1034 = vmatmul.mubr.f32.gmra.mrb[0].mxu0 %v156
    %v1035 = vpop.f32.mrb[0].mxu0
    %v1036 = vadd.f32 %v683, %v1035
    %v1037 = vpop.f32.mrb[0].mxu0
    %v1038 = vadd.f32 %v685, %v1037
    %1039 = vmatprep.mubr.f32.mxu0 0.0
    %1040 = vmatmul.mubr.f32.gmra.mrb[0].mxu0 %v159
    %v1041 = vpop.f32.mrb[0].mxu0
    %v1042 = vadd.f32 %v689, %v1041
    %v1043 = vpop.f32.mrb[0].mxu0
    %v1044 = vadd.f32 %v691, %v1043
    %1045 = vmatprep.mubr.f32.mxu0 0.0
    %1046 = vmatmul.mubr.f32.gmra.mrb[0].mxu0 %v162
    %v1047 = vpop.f32.mrb[0].mxu0
    %v1048 = vadd.f32 %v695, %v1047
    %v1049 = vpop.f32.mrb[0].mxu0
    %v1050 = vadd.f32 %v697, %v1049
    %1051 = vmatprep.mubr.f32.mxu0 0.0
    %1052 = vmatmul.mubr.f32.gmra.mrb[0].mxu0 %v165
    %v1053 = vpop.f32.mrb[0].mxu0
    %v1054 = vadd.f32 %v701, %v1053
    %v1055 = vpop.f32.mrb[0].mxu0
    %v1056 = vadd.f32 %v703, %v1055
    %1057 = vmatprep.mubr.f32.mxu0 0.0
    %1058 = vmatmul.mubr.f32.gmra.mrb[0].mxu0 %v168
    %v1059 = vpop.f32.mrb[0].mxu0
    %v1060 = vadd.f32 %v707, %v1059
    %v1061 = vpop.f32.mrb[0].mxu0
    %v1062 = vadd.f32 %v709, %v1061
    %1063 = vmatprep.mubr.f32.mxu0 0.0
    %1064 = vmatmul.mubr.f32.gmra.mrb[0].mxu0 %v171
    %v1065 = vpop.f32.mrb[0].mxu0
    %v1066 = vadd.f32 %v713, %v1065
    %v1067 = vpop.f32.mrb[0].mxu0
    %v1068 = vadd.f32 %v715, %v1067
    %1069 = vmatprep.mubr.f32.mxu0 0.0
    %1070 = vmatmul.mubr.f32.gmra.mrb[0].mxu0 %v174
    %v1071 = vpop.f32.mrb[0].mxu0
    %v1072 = vadd.f32 %v719, %v1071
    %v1073 = vpop.f32.mrb[0].mxu0
    %v1074 = vadd.f32 %v721, %v1073
    %1075 = vmatprep.mubr.f32.mxu0 0.0
    %1076 = vmatmul.mubr.f32.gmra.mrb[0].mxu0 %v177
    %v1077 = vpop.f32.mrb[0].mxu0
    %v1078 = vadd.f32 %v725, %v1077
    %v1079 = vpop.f32.mrb[0].mxu0
    %v1080 = vadd.f32 %v727, %v1079
    %1081 = vmatprep.mubr.f32.mxu0 0.0
    %1082 = vmatmul.mubr.f32.gmra.mrb[0].mxu0 %v180
    %v1083 = vpop.f32.mrb[0].mxu0
    %v1084 = vadd.f32 %v731, %v1083
    %v1085 = vpop.f32.mrb[0].mxu0
    %v1086 = vadd.f32 %v733, %v1085
    %1087 = vmatprep.mubr.f32.mxu0 0.0
    %1088 = vmatmul.mubr.f32.gmra.mrb[0].mxu0 %v183
    %v1089 = vpop.f32.mrb[0].mxu0
    %v1090 = vadd.f32 %v737, %v1089
    %v1091 = vpop.f32.mrb[0].mxu0
    %v1092 = vadd.f32 %v739, %v1091
    %1093 = vmatprep.mubr.f32.mxu0 0.0
    %1094 = vmatmul.mubr.f32.gmra.mrb[0].mxu0 %v186
    %v1095 = vpop.f32.mrb[0].mxu0
    %v1096 = vadd.f32 %v743, %v1095
    %v1097 = vpop.f32.mrb[0].mxu0
    %v1098 = vadd.f32 %v745, %v1097
    %1099 = vmatprep.mubr.f32.mxu0 0.0
    %1100 = vmatmul.mubr.f32.gmra.mrb[0].mxu0 %v189
    %v1101 = vpop.f32.mrb[0].mxu0
    %v1102 = vadd.f32 %v749, %v1101
    %v1103 = vpop.f32.mrb[0].mxu0
    %v1104 = vadd.f32 %v751, %v1103
    %1105 = vmatprep.mubr.f32.mxu0 0.0
    %1106 = vmatmul.mubr.f32.gmra.mrb[0].mxu0 %v192
    %v1107 = vpop.f32.mrb[0].mxu0
    %v1108 = vadd.f32 %v755, %v1107
    %v1109 = vpop.f32.mrb[0].mxu0
    %v1110 = vadd.f32 %v757, %v1109
    %1111 = vmatprep.mubr.f32.mxu0 0.0
    %1112 = vmatmul.mubr.f32.gmra.mrb[0].mxu0 %v195
    %v1113 = vpop.f32.mrb[0].mxu0
    %v1114 = vadd.f32 %v761, %v1113
    %v1115 = vpop.f32.mrb[0].mxu0
    %v1116 = vadd.f32 %v763, %v1115
    %1117 = vmatprep.mubr.f32.mxu0 0.0
    %1118 = vmatmul.mubr.f32.gmra.mrb[0].mxu0 %v198
    %v1119 = vpop.f32.mrb[0].mxu0
    %v1120 = vadd.f32 %v767, %v1119
    %v1121 = vpop.f32.mrb[0].mxu0
    %v1122 = vadd.f32 %v769, %v1121
    %1123 = vmatprep.mubr.f32.mxu0 0.0
    %1124 = vmatmul.mubr.f32.gmra.mrb[0].mxu0 %v201
    %v1125 = vpop.f32.mrb[0].mxu0
    %v1126 = vadd.f32 %v773, %v1125
    %v1127 = vpop.f32.mrb[0].mxu0
    %v1128 = vadd.f32 %v775, %v1127
    %1129 = vmatprep.mubr.f32.mxu0 0.0
    %1130 = vmatmul.mubr.f32.gmra.mrb[0].mxu0 %v204
    %v1131 = vpop.f32.mrb[0].mxu0
    %v1132 = vadd.f32 %v779, %v1131
    %v1133 = vpop.f32.mrb[0].mxu0
    %v1134 = vadd.f32 %v781, %v1133
    %1135 = vmatprep.mubr.f32.mxu0 0.0
    %1136 = vmatmul.mubr.f32.gmra.mrb[0].mxu0 %v207
    %v1137 = vpop.f32.mrb[0].mxu0
    %v1138 = vadd.f32 %v785, %v1137
    %v1139 = vpop.f32.mrb[0].mxu0
    %v1140 = vadd.f32 %v787, %v1139
    %1141 = vmatprep.mubr.f32.mxu0 0.0
    %1142 = vmatmul.mubr.f32.gmra.mrb[0].mxu0 %v210
    %v1143 = vpop.f32.mrb[0].mxu0
    %v1144 = vadd.f32 %v791, %v1143
    %v1145 = vpop.f32.mrb[0].mxu0
    %v1146 = vadd.f32 %v793, %v1145
    %1147 = vmatprep.mubr.f32.mxu0 0.0
    %1148 = vmatmul.mubr.f32.gmra.mrb[0].mxu0 %v213
    %v1149 = vpop.f32.mrb[0].mxu0
    %v1150 = vadd.f32 %v797, %v1149
    %v1151 = vpop.f32.mrb[0].mxu0
    %v1152 = vadd.f32 %v799, %v1151
    %1153 = vmatprep.mubr.f32.mxu0 0.0
    %1154 = vmatmul.mubr.f32.gmra.mrb[0].mxu0 %v216
    %v1155 = vpop.f32.mrb[0].mxu0
    %v1156 = vadd.f32 %v803, %v1155
    %v1157 = vpop.f32.mrb[0].mxu0
    %v1158 = vadd.f32 %v805, %v1157
    %1159 = vmatprep.mubr.f32.mxu0 0.0
    %1160 = vmatmul.mubr.f32.gmra.mrb[0].mxu0 %v219
    %v1161 = vpop.f32.mrb[0].mxu0
    %v1162 = vadd.f32 %v809, %v1161
    %v1163 = vpop.f32.mrb[0].mxu0
    %v1164 = vadd.f32 %v811, %v1163
    %1165 = vmatprep.mubr.f32.mxu0 0.0
    %1166 = vmatmul.mubr.f32.gmra.mrb[0].mxu0 %v222
    %v1167 = vpop.f32.mrb[0].mxu0
    %v1168 = vadd.f32 %v815, %v1167
    %v1169 = vpop.f32.mrb[0].mxu0
    %v1170 = vadd.f32 %v817, %v1169
    %1171 = vmatprep.mubr.f32.mxu0 0.0
    %1172 = vmatmul.mubr.f32.gmra.mrb[0].mxu0 %v225
    %v1173 = vpop.f32.mrb[0].mxu0
    %v1174 = vadd.f32 %v821, %v1173
    %v1175 = vpop.f32.mrb[0].mxu0
    %v1176 = vadd.f32 %v823, %v1175
    %1177 = vmatprep.mubr.f32.mxu0 0.0
    %1178 = vmatmul.mubr.f32.gmra.mrb[0].mxu0 %v228
    %v1179 = vpop.f32.mrb[0].mxu0
    %v1180 = vadd.f32 %v827, %v1179
    %v1181 = vpop.f32.mrb[0].mxu0
    %v1182 = vadd.f32 %v829, %v1181
    %1183 = vmatprep.mubr.f32.mxu0 0.0
    %1184 = vmatmul.mubr.f32.gmra.mrb[0].mxu0 %v231
    %v1185 = vpop.f32.mrb[0].mxu0
    %v1186 = vadd.f32 %v833, %v1185
    %v1187 = vpop.f32.mrb[0].mxu0
    %v1188 = vadd.f32 %v835, %v1187
    %1189 = vmatprep.mubr.f32.mxu0 0.0
    %1190 = vmatmul.mubr.f32.gmra.mrb[0].mxu0 %v234
    %v1191 = vpop.f32.mrb[0].mxu0
    %v1192 = vadd.f32 %v839, %v1191
    %v1193 = vpop.f32.mrb[0].mxu0
    %v1194 = vadd.f32 %v841, %v1193
    %1195 = vmatprep.mubr.f32.mxu0 0.0
    %1196 = vmatmul.mubr.f32.gmra.mrb[0].mxu0 %v237
    %v1197 = vpop.f32.mrb[0].mxu0
    %v1198 = vadd.f32 %v845, %v1197
    %v1199 = vpop.f32.mrb[0].mxu0
    %v1200 = vadd.f32 %v847, %v1199
    %1201 = vmatprep.mubr.f32.mxu0 0.0
    %1202 = vmatmul.mubr.f32.gmra.mrb[0].mxu0 %v240
    %v1203 = vpop.f32.mrb[0].mxu0
    %v1204 = vadd.f32 %v851, %v1203
    %v1205 = vpop.f32.mrb[0].mxu0
    %v1206 = vadd.f32 %v853, %v1205
    %1207 = vmatprep.mubr.f32.mxu0 0.0
    %1208 = vmatmul.mubr.f32.gmra.mrb[0].mxu0 %v243
    %v1209 = vpop.f32.mrb[0].mxu0
    %v1210 = vadd.f32 %v857, %v1209
    %v1211 = vpop.f32.mrb[0].mxu0
    %v1212 = vadd.f32 %v859, %v1211
    %1213 = vmatprep.mubr.f32.mxu0 0.0
    %1214 = vmatmul.mubr.f32.gmra.mrb[0].mxu0 %v246
    %v1215 = vpop.f32.mrb[0].mxu0
    %v1216 = vadd.f32 %v863, %v1215
    %v1217 = vpop.f32.mrb[0].mxu0
    %v1218 = vadd.f32 %v865, %v1217
    %1219 = vmatprep.mubr.f32.mxu0 0.0
    %1220 = vmatmul.mubr.f32.gmra.mrb[0].mxu0 %v249
    %v1221 = vpop.f32.mrb[0].mxu0
    %v1222 = vadd.f32 %v869, %v1221
    %v1223 = vpop.f32.mrb[0].mxu0
    %v1224 = vadd.f32 %v871, %v1223
    %1225 = vmatprep.mubr.f32.mxu0 0.0
    %1226 = vmatmul.mubr.f32.gmra.mrb[0].mxu0 %v252
    %v1227 = vpop.f32.mrb[0].mxu0
    %v1228 = vadd.f32 %v875, %v1227
    %v1229 = vpop.f32.mrb[0].mxu0
    %v1230 = vadd.f32 %v877, %v1229
    %1231 = vmatprep.mubr.f32.mxu0 0.0
    %1232 = vmatmul.mubr.f32.gmra.mrb[0].mxu0 %v255
    %v1233 = vpop.f32.mrb[0].mxu0
    %v1234 = vadd.f32 %v881, %v1233
    %v1235 = vpop.f32.mrb[0].mxu0
    %v1236 = vadd.f32 %v883, %v1235
    %1237 = vmatprep.mubr.f32.mxu0 0.0
    %1238 = vmatmul.mubr.f32.gmra.mrb[0].mxu0 %v258
    %v1239 = vpop.f32.mrb[0].mxu0
    %v1240 = vadd.f32 %v887, %v1239
    %v1241 = vpop.f32.mrb[0].mxu0
    %v1242 = vadd.f32 %v889, %v1241
    %1243 = vmatprep.mubr.f32.mxu0 0.0
    %1244 = vmatmul.mubr.f32.gmra.mrb[0].mxu0 %v261
    %v1245 = vpop.f32.mrb[0].mxu0
    %v1246 = vadd.f32 %v893, %v1245
    %v1247 = vpop.f32.mrb[0].mxu0
    %v1248 = vadd.f32 %v895, %v1247
    %1249 = vmatprep.mubr.f32.mxu0 0.0
    %1250 = vmatmul.mubr.f32.gmra.mrb[0].mxu0 %v264
    %v1251 = vpop.f32.mrb[0].mxu0
    %v1252 = vadd.f32 %v899, %v1251
    %v1253 = vpop.f32.mrb[0].mxu0
    %v1254 = vadd.f32 %v901, %v1253
    %1255 = vmatprep.mubr.f32.mxu0 0.0
    %1256 = vmatmul.mubr.f32.gmra.mrb[0].mxu0 %v267
    %v1257 = vpop.f32.mrb[0].mxu0
    %v1258 = vadd.f32 %v905, %v1257
    %v1259 = vpop.f32.mrb[0].mxu0
    %v1260 = vadd.f32 %v907, %v1259
    %1261 = vdwg.mxu0
    %v1262 = vmul.f32 %v976, 0.5
    %v1263 = vmul.f32 %v978, 0.5
    %v1264 = vmul.f32 %v982, 0.5
    %v1265 = vmul.f32 %v984, 0.5
    %v1266 = vmul.f32 %v988, 0.5
    %v1267 = vmul.f32 %v990, 0.5
    %v1268 = vmul.f32 %v994, 0.5
    %v1269 = vmul.f32 %v996, 0.5
    %v1270 = vmul.f32 %v1000, 0.5
    %v1271 = vmul.f32 %v1002, 0.5
    %v1272 = vmul.f32 %v1006, 0.5
    %v1273 = vmul.f32 %v1008, 0.5
    %v1274 = vmul.f32 %v1012, 0.5
    %v1275 = vmul.f32 %v1014, 0.5
    %v1276 = vmul.f32 %v1018, 0.5
    %v1277 = vmul.f32 %v1020, 0.5
    %v1278 = vmul.f32 %v1024, 0.5
    %v1279 = vmul.f32 %v1026, 0.5
    %v1280 = vmul.f32 %v1030, 0.5
    %v1281 = vmul.f32 %v1032, 0.5
    %v1282 = vmul.f32 %v1036, 0.5
    %v1283 = vmul.f32 %v1038, 0.5
    %v1284 = vmul.f32 %v1042, 0.5
    %v1285 = vmul.f32 %v1044, 0.5
    %v1286 = vmul.f32 %v1048, 0.5
    %v1287 = vmul.f32 %v1050, 0.5
    %v1288 = vmul.f32 %v1054, 0.5
    %v1289 = vmul.f32 %v1056, 0.5
    %v1290 = vmul.f32 %v1060, 0.5
    %v1291 = vmul.f32 %v1062, 0.5
    %v1292 = vmul.f32 %v1066, 0.5
    %v1293 = vmul.f32 %v1068, 0.5
    %v1294 = vmul.f32 %v1072, 0.5
    %v1295 = vmul.f32 %v1074, 0.5
    %v1296 = vmul.f32 %v1078, 0.5
    %v1297 = vmul.f32 %v1080, 0.5
    %v1298 = vmul.f32 %v1084, 0.5
    %v1299 = vmul.f32 %v1086, 0.5
    %v1300 = vmul.f32 %v1090, 0.5
    %v1301 = vmul.f32 %v1092, 0.5
    %v1302 = vmul.f32 %v1096, 0.5
    %v1303 = vmul.f32 %v1098, 0.5
    %v1304 = vmul.f32 %v1102, 0.5
    %v1305 = vmul.f32 %v1104, 0.5
    %v1306 = vmul.f32 %v1108, 0.5
    %v1307 = vmul.f32 %v1110, 0.5
    %v1308 = vmul.f32 %v1114, 0.5
    %v1309 = vmul.f32 %v1116, 0.5
    %v1310 = vmul.f32 %v1120, 0.5
    %v1311 = vmul.f32 %v1122, 0.5
    %v1312 = vmul.f32 %v1126, 0.5
    %v1313 = vmul.f32 %v1128, 0.5
    %v1314 = vmul.f32 %v1132, 0.5
    %v1315 = vmul.f32 %v1134, 0.5
    %v1316 = vmul.f32 %v1138, 0.5
    %v1317 = vmul.f32 %v1140, 0.5
    %v1318 = vmul.f32 %v1144, 0.5
    %v1319 = vmul.f32 %v1146, 0.5
    %v1320 = vmul.f32 %v1150, 0.5
    %v1321 = vmul.f32 %v1152, 0.5
    %v1322 = vmul.f32 %v1156, 0.5
    %v1323 = vmul.f32 %v1158, 0.5
    %v1324 = vmul.f32 %v1162, 0.5
    %v1325 = vmul.f32 %v1164, 0.5
    %v1326 = vmul.f32 %v1168, 0.5
    %v1327 = vmul.f32 %v1170, 0.5
    %v1328 = vmul.f32 %v1174, 0.5
    %v1329 = vmul.f32 %v1176, 0.5
    %v1330 = vmul.f32 %v1180, 0.5
    %v1331 = vmul.f32 %v1182, 0.5
    %v1332 = vmul.f32 %v1186, 0.5
    %v1333 = vmul.f32 %v1188, 0.5
    %v1334 = vmul.f32 %v1192, 0.5
    %v1335 = vmul.f32 %v1194, 0.5
    %v1336 = vmul.f32 %v1198, 0.5
    %v1337 = vmul.f32 %v1200, 0.5
    %v1338 = vmul.f32 %v1204, 0.5
    %v1339 = vmul.f32 %v1206, 0.5
    %v1340 = vmul.f32 %v1210, 0.5
    %v1341 = vmul.f32 %v1212, 0.5
    %v1342 = vmul.f32 %v1216, 0.5
    %v1343 = vmul.f32 %v1218, 0.5
    %v1344 = vmul.f32 %v1222, 0.5
    %v1345 = vmul.f32 %v1224, 0.5
    %v1346 = vmul.f32 %v1228, 0.5
    %v1347 = vmul.f32 %v1230, 0.5
    %v1348 = vmul.f32 %v1234, 0.5
    %v1349 = vmul.f32 %v1236, 0.5
    %v1350 = vmul.f32 %v1240, 0.5
    %v1351 = vmul.f32 %v1242, 0.5
    %v1352 = vmul.f32 %v1246, 0.5
    %v1353 = vmul.f32 %v1248, 0.5
    %v1354 = vmul.f32 %v1252, 0.5
    %v1355 = vmul.f32 %v1254, 0.5
    %v1356 = vmul.f32 %v1258, 0.5
    %v1357 = vmul.f32 %v1260, 0.5
    %v1358 = vmul.f32 %v976, 0.70710677
    %v1359 = vmul.f32 %v978, 0.70710677
    %v1360 = vmul.f32 %v982, 0.70710677
    %v1361 = vmul.f32 %v984, 0.70710677
    %v1362 = vmul.f32 %v988, 0.70710677
    %v1363 = vmul.f32 %v990, 0.70710677
    %v1364 = vmul.f32 %v994, 0.70710677
    %v1365 = vmul.f32 %v996, 0.70710677
    %v1366 = vmul.f32 %v1000, 0.70710677
    %v1367 = vmul.f32 %v1002, 0.70710677
    %v1368 = vmul.f32 %v1006, 0.70710677
    %v1369 = vmul.f32 %v1008, 0.70710677
    %v1370 = vmul.f32 %v1012, 0.70710677
    %v1371 = vmul.f32 %v1014, 0.70710677
    %v1372 = vmul.f32 %v1018, 0.70710677
    %v1373 = vmul.f32 %v1020, 0.70710677
    %v1374 = vmul.f32 %v1024, 0.70710677
    %v1375 = vmul.f32 %v1026, 0.70710677
    %v1376 = vmul.f32 %v1030, 0.70710677
    %v1377 = vmul.f32 %v1032, 0.70710677
    %v1378 = vmul.f32 %v1036, 0.70710677
    %v1379 = vmul.f32 %v1038, 0.70710677
    %v1380 = vmul.f32 %v1042, 0.70710677
    %v1381 = vmul.f32 %v1044, 0.70710677
    %v1382 = vmul.f32 %v1048, 0.70710677
    %v1383 = vmul.f32 %v1050, 0.70710677
    %v1384 = vmul.f32 %v1054, 0.70710677
    %v1385 = vmul.f32 %v1056, 0.70710677
    %v1386 = vmul.f32 %v1060, 0.70710677
    %v1387 = vmul.f32 %v1062, 0.70710677
    %v1388 = vmul.f32 %v1066, 0.70710677
    %v1389 = vmul.f32 %v1068, 0.70710677
    %v1390 = vmul.f32 %v1072, 0.70710677
    %v1391 = vmul.f32 %v1074, 0.70710677
    %v1392 = vmul.f32 %v1078, 0.70710677
    %v1393 = vmul.f32 %v1080, 0.70710677
    %v1394 = vmul.f32 %v1084, 0.70710677
    %v1395 = vmul.f32 %v1086, 0.70710677
    %v1396 = vmul.f32 %v1090, 0.70710677
    %v1397 = vmul.f32 %v1092, 0.70710677
    %v1398 = vmul.f32 %v1096, 0.70710677
    %v1399 = vmul.f32 %v1098, 0.70710677
    %v1400 = vmul.f32 %v1102, 0.70710677
    %v1401 = vmul.f32 %v1104, 0.70710677
    %v1402 = vmul.f32 %v1108, 0.70710677
    %v1403 = vmul.f32 %v1110, 0.70710677
    %v1404 = vmul.f32 %v1114, 0.70710677
    %v1405 = vmul.f32 %v1116, 0.70710677
    %v1406 = vmul.f32 %v1120, 0.70710677
    %v1407 = vmul.f32 %v1122, 0.70710677
    %v1408 = vmul.f32 %v1126, 0.70710677
    %v1409 = vmul.f32 %v1128, 0.70710677
    %v1410 = vmul.f32 %v1132, 0.70710677
    %v1411 = vmul.f32 %v1134, 0.70710677
    %v1412 = vmul.f32 %v1138, 0.70710677
    %v1413 = vmul.f32 %v1140, 0.70710677
    %v1414 = vmul.f32 %v1144, 0.70710677
    %v1415 = vmul.f32 %v1146, 0.70710677
    %v1416 = vmul.f32 %v1150, 0.70710677
    %v1417 = vmul.f32 %v1152, 0.70710677
    %v1418 = vmul.f32 %v1156, 0.70710677
    %v1419 = vmul.f32 %v1158, 0.70710677
    %v1420 = vmul.f32 %v1162, 0.70710677
    %v1421 = vmul.f32 %v1164, 0.70710677
    %v1422 = vmul.f32 %v1168, 0.70710677
    %v1423 = vmul.f32 %v1170, 0.70710677
    %v1424 = vmul.f32 %v1174, 0.70710677
    %v1425 = vmul.f32 %v1176, 0.70710677
    %v1426 = vmul.f32 %v1180, 0.70710677
    %v1427 = vmul.f32 %v1182, 0.70710677
    %v1428 = vmul.f32 %v1186, 0.70710677
    %v1429 = vmul.f32 %v1188, 0.70710677
    %v1430 = vmul.f32 %v1192, 0.70710677
    %v1431 = vmul.f32 %v1194, 0.70710677
    %v1432 = vmul.f32 %v1198, 0.70710677
    %v1433 = vmul.f32 %v1200, 0.70710677
    %v1434 = vmul.f32 %v1204, 0.70710677
    %v1435 = vmul.f32 %v1206, 0.70710677
    %v1436 = vmul.f32 %v1210, 0.70710677
    %v1437 = vmul.f32 %v1212, 0.70710677
    %v1438 = vmul.f32 %v1216, 0.70710677
    %v1439 = vmul.f32 %v1218, 0.70710677
    %v1440 = vmul.f32 %v1222, 0.70710677
    %v1441 = vmul.f32 %v1224, 0.70710677
    %v1442 = vmul.f32 %v1228, 0.70710677
    %v1443 = vmul.f32 %v1230, 0.70710677
    %v1444 = vmul.f32 %v1234, 0.70710677
    %v1445 = vmul.f32 %v1236, 0.70710677
    %v1446 = vmul.f32 %v1240, 0.70710677
    %v1447 = vmul.f32 %v1242, 0.70710677
    %v1448 = vmul.f32 %v1246, 0.70710677
    %v1449 = vmul.f32 %v1248, 0.70710677
    %v1450 = vmul.f32 %v1252, 0.70710677
    %v1451 = vmul.f32 %v1254, 0.70710677
    %v1452 = vmul.f32 %v1258, 0.70710677
    %v1453 = vmul.f32 %v1260, 0.70710677
    %v1454 = verf.f32.pop %v1358
    %v1455 = verf.f32.pop %v1359
    %v1456 = verf.f32.pop %v1360
    %v1457 = verf.f32.pop %v1361
    %v1458 = verf.f32.pop %v1362
    %v1459 = verf.f32.pop %v1363
    %v1460 = verf.f32.pop %v1364
    %v1461 = verf.f32.pop %v1365
    %v1462 = verf.f32.pop %v1366
    %v1463 = verf.f32.pop %v1367
    %v1464 = verf.f32.pop %v1368
    %v1465 = verf.f32.pop %v1369
    %v1466 = verf.f32.pop %v1370
    %v1467 = verf.f32.pop %v1371
    %v1468 = verf.f32.pop %v1372
    %v1469 = verf.f32.pop %v1373
    %v1470 = verf.f32.pop %v1374
    %v1471 = verf.f32.pop %v1375
    %v1472 = verf.f32.pop %v1376
    %v1473 = verf.f32.pop %v1377
    %v1474 = verf.f32.pop %v1378
    %v1475 = verf.f32.pop %v1379
    %v1476 = verf.f32.pop %v1380
    %v1477 = verf.f32.pop %v1381
    %v1478 = verf.f32.pop %v1382
    %v1479 = verf.f32.pop %v1383
    %v1480 = verf.f32.pop %v1384
    %v1481 = verf.f32.pop %v1385
    %v1482 = verf.f32.pop %v1386
    %v1483 = verf.f32.pop %v1387
    %v1484 = verf.f32.pop %v1388
    %v1485 = verf.f32.pop %v1389
    %v1486 = verf.f32.pop %v1390
    %v1487 = verf.f32.pop %v1391
    %v1488 = verf.f32.pop %v1392
    %v1489 = verf.f32.pop %v1393
    %v1490 = verf.f32.pop %v1394
    %v1491 = verf.f32.pop %v1395
    %v1492 = verf.f32.pop %v1396
    %v1493 = verf.f32.pop %v1397
    %v1494 = verf.f32.pop %v1398
    %v1495 = verf.f32.pop %v1399
    %v1496 = verf.f32.pop %v1400
    %v1497 = verf.f32.pop %v1401
    %v1498 = verf.f32.pop %v1402
    %v1499 = verf.f32.pop %v1403
    %v1500 = verf.f32.pop %v1404
    %v1501 = verf.f32.pop %v1405
    %v1502 = verf.f32.pop %v1406
    %v1503 = verf.f32.pop %v1407
    %v1504 = verf.f32.pop %v1408
    %v1505 = verf.f32.pop %v1409
    %v1506 = verf.f32.pop %v1410
    %v1507 = verf.f32.pop %v1411
    %v1508 = verf.f32.pop %v1412
    %v1509 = verf.f32.pop %v1413
    %v1510 = verf.f32.pop %v1414
    %v1511 = verf.f32.pop %v1415
    %v1512 = verf.f32.pop %v1416
    %v1513 = verf.f32.pop %v1417
    %v1514 = verf.f32.pop %v1418
    %v1515 = verf.f32.pop %v1419
    %v1516 = verf.f32.pop %v1420
    %v1517 = verf.f32.pop %v1421
    %v1518 = verf.f32.pop %v1422
    %v1519 = verf.f32.pop %v1423
    %v1520 = verf.f32.pop %v1424
    %v1521 = verf.f32.pop %v1425
    %v1522 = verf.f32.pop %v1426
    %v1523 = verf.f32.pop %v1427
    %v1524 = verf.f32.pop %v1428
    %v1525 = verf.f32.pop %v1429
    %v1526 = verf.f32.pop %v1430
    %v1527 = verf.f32.pop %v1431
    %v1528 = verf.f32.pop %v1432
    %v1529 = verf.f32.pop %v1433
    %v1530 = verf.f32.pop %v1434
    %v1531 = verf.f32.pop %v1435
    %v1532 = verf.f32.pop %v1436
    %v1533 = verf.f32.pop %v1437
    %v1534 = verf.f32.pop %v1438
    %v1535 = verf.f32.pop %v1439
    %v1536 = verf.f32.pop %v1440
    %v1537 = verf.f32.pop %v1441
    %v1538 = verf.f32.pop %v1442
    %v1539 = verf.f32.pop %v1443
    %v1540 = verf.f32.pop %v1444
    %v1541 = verf.f32.pop %v1445
    %v1542 = verf.f32.pop %v1446
    %v1543 = verf.f32.pop %v1447
    %v1544 = verf.f32.pop %v1448
    %v1545 = verf.f32.pop %v1449
    %v1546 = verf.f32.pop %v1450
    %v1547 = verf.f32.pop %v1451
    %v1548 = verf.f32.pop %v1452
    %v1549 = verf.f32.pop %v1453
    %v1550 = vadd.f32 %v1454, 1.0
    %v1551 = vadd.f32 %v1455, 1.0
    %v1552 = vadd.f32 %v1456, 1.0
    %v1553 = vadd.f32 %v1457, 1.0
    %v1554 = vadd.f32 %v1458, 1.0
    %v1555 = vadd.f32 %v1459, 1.0
    %v1556 = vadd.f32 %v1460, 1.0
    %v1557 = vadd.f32 %v1461, 1.0
    %v1558 = vadd.f32 %v1462, 1.0
    %v1559 = vadd.f32 %v1463, 1.0
    %v1560 = vadd.f32 %v1464, 1.0
    %v1561 = vadd.f32 %v1465, 1.0
    %v1562 = vadd.f32 %v1466, 1.0
    %v1563 = vadd.f32 %v1467, 1.0
    %v1564 = vadd.f32 %v1468, 1.0
    %v1565 = vadd.f32 %v1469, 1.0
    %v1566 = vadd.f32 %v1470, 1.0
    %v1567 = vadd.f32 %v1471, 1.0
    %v1568 = vadd.f32 %v1472, 1.0
    %v1569 = vadd.f32 %v1473, 1.0
    %v1570 = vadd.f32 %v1474, 1.0
    %v1571 = vadd.f32 %v1475, 1.0
    %v1572 = vadd.f32 %v1476, 1.0
    %v1573 = vadd.f32 %v1477, 1.0
    %v1574 = vadd.f32 %v1478, 1.0
    %v1575 = vadd.f32 %v1479, 1.0
    %v1576 = vadd.f32 %v1480, 1.0
    %v1577 = vadd.f32 %v1481, 1.0
    %v1578 = vadd.f32 %v1482, 1.0
    %v1579 = vadd.f32 %v1483, 1.0
    %v1580 = vadd.f32 %v1484, 1.0
    %v1581 = vadd.f32 %v1485, 1.0
    %v1582 = vadd.f32 %v1486, 1.0
    %v1583 = vadd.f32 %v1487, 1.0
    %v1584 = vadd.f32 %v1488, 1.0
    %v1585 = vadd.f32 %v1489, 1.0
    %v1586 = vadd.f32 %v1490, 1.0
    %v1587 = vadd.f32 %v1491, 1.0
    %v1588 = vadd.f32 %v1492, 1.0
    %v1589 = vadd.f32 %v1493, 1.0
    %v1590 = vadd.f32 %v1494, 1.0
    %v1591 = vadd.f32 %v1495, 1.0
    %v1592 = vadd.f32 %v1496, 1.0
    %v1593 = vadd.f32 %v1497, 1.0
    %v1594 = vadd.f32 %v1498, 1.0
    %v1595 = vadd.f32 %v1499, 1.0
    %v1596 = vadd.f32 %v1500, 1.0
    %v1597 = vadd.f32 %v1501, 1.0
    %v1598 = vadd.f32 %v1502, 1.0
    %v1599 = vadd.f32 %v1503, 1.0
    %v1600 = vadd.f32 %v1504, 1.0
    %v1601 = vadd.f32 %v1505, 1.0
    %v1602 = vadd.f32 %v1506, 1.0
    %v1603 = vadd.f32 %v1507, 1.0
    %v1604 = vadd.f32 %v1508, 1.0
    %v1605 = vadd.f32 %v1509, 1.0
    %v1606 = vadd.f32 %v1510, 1.0
    %v1607 = vadd.f32 %v1511, 1.0
    %v1608 = vadd.f32 %v1512, 1.0
    %v1609 = vadd.f32 %v1513, 1.0
    %v1610 = vadd.f32 %v1514, 1.0
    %v1611 = vadd.f32 %v1515, 1.0
    %v1612 = vadd.f32 %v1516, 1.0
    %v1613 = vadd.f32 %v1517, 1.0
    %v1614 = vadd.f32 %v1518, 1.0
    %v1615 = vadd.f32 %v1519, 1.0
    %v1616 = vadd.f32 %v1520, 1.0
    %v1617 = vadd.f32 %v1521, 1.0
    %v1618 = vadd.f32 %v1522, 1.0
    %v1619 = vadd.f32 %v1523, 1.0
    %v1620 = vadd.f32 %v1524, 1.0
    %v1621 = vadd.f32 %v1525, 1.0
    %v1622 = vadd.f32 %v1526, 1.0
    %v1623 = vadd.f32 %v1527, 1.0
    %v1624 = vadd.f32 %v1528, 1.0
    %v1625 = vadd.f32 %v1529, 1.0
    %v1626 = vadd.f32 %v1530, 1.0
    %v1627 = vadd.f32 %v1531, 1.0
    %v1628 = vadd.f32 %v1532, 1.0
    %v1629 = vadd.f32 %v1533, 1.0
    %v1630 = vadd.f32 %v1534, 1.0
    %v1631 = vadd.f32 %v1535, 1.0
    %v1632 = vadd.f32 %v1536, 1.0
    %v1633 = vadd.f32 %v1537, 1.0
    %v1634 = vadd.f32 %v1538, 1.0
    %v1635 = vadd.f32 %v1539, 1.0
    %v1636 = vadd.f32 %v1540, 1.0
    %v1637 = vadd.f32 %v1541, 1.0
    %v1638 = vadd.f32 %v1542, 1.0
    %v1639 = vadd.f32 %v1543, 1.0
    %v1640 = vadd.f32 %v1544, 1.0
    %v1641 = vadd.f32 %v1545, 1.0
    %v1642 = vadd.f32 %v1546, 1.0
    %v1643 = vadd.f32 %v1547, 1.0
    %v1644 = vadd.f32 %v1548, 1.0
    %v1645 = vadd.f32 %v1549, 1.0
    %v1646 = vmul.f32 %v1262, %v1550
    %v1647 = vmul.f32 %v1263, %v1551
    %v1648 = vmul.f32 %v1264, %v1552
    %v1649 = vmul.f32 %v1265, %v1553
    %v1650 = vmul.f32 %v1266, %v1554
    %v1651 = vmul.f32 %v1267, %v1555
    %v1652 = vmul.f32 %v1268, %v1556
    %v1653 = vmul.f32 %v1269, %v1557
    %v1654 = vmul.f32 %v1270, %v1558
    %v1655 = vmul.f32 %v1271, %v1559
    %v1656 = vmul.f32 %v1272, %v1560
    %v1657 = vmul.f32 %v1273, %v1561
    %v1658 = vmul.f32 %v1274, %v1562
    %v1659 = vmul.f32 %v1275, %v1563
    %v1660 = vmul.f32 %v1276, %v1564
    %v1661 = vmul.f32 %v1277, %v1565
    %v1662 = vmul.f32 %v1278, %v1566
    %v1663 = vmul.f32 %v1279, %v1567
    %v1664 = vmul.f32 %v1280, %v1568
    %v1665 = vmul.f32 %v1281, %v1569
    %v1666 = vmul.f32 %v1282, %v1570
    %v1667 = vmul.f32 %v1283, %v1571
    %v1668 = vmul.f32 %v1284, %v1572
    %v1669 = vmul.f32 %v1285, %v1573
    %v1670 = vmul.f32 %v1286, %v1574
    %v1671 = vmul.f32 %v1287, %v1575
    %v1672 = vmul.f32 %v1288, %v1576
    %v1673 = vmul.f32 %v1289, %v1577
    %v1674 = vmul.f32 %v1290, %v1578
    %v1675 = vmul.f32 %v1291, %v1579
    %v1676 = vmul.f32 %v1292, %v1580
    %v1677 = vmul.f32 %v1293, %v1581
    %v1678 = vmul.f32 %v1294, %v1582
    %v1679 = vmul.f32 %v1295, %v1583
    %v1680 = vmul.f32 %v1296, %v1584
    %v1681 = vmul.f32 %v1297, %v1585
    %v1682 = vmul.f32 %v1298, %v1586
    %v1683 = vmul.f32 %v1299, %v1587
    %v1684 = vmul.f32 %v1300, %v1588
    %v1685 = vmul.f32 %v1301, %v1589
    %v1686 = vmul.f32 %v1302, %v1590
    %v1687 = vmul.f32 %v1303, %v1591
    %v1688 = vmul.f32 %v1304, %v1592
    %v1689 = vmul.f32 %v1305, %v1593
    %v1690 = vmul.f32 %v1306, %v1594
    %v1691 = vmul.f32 %v1307, %v1595
    %v1692 = vmul.f32 %v1308, %v1596
    %v1693 = vmul.f32 %v1309, %v1597
    %v1694 = vmul.f32 %v1310, %v1598
    %v1695 = vmul.f32 %v1311, %v1599
    %v1696 = vmul.f32 %v1312, %v1600
    %v1697 = vmul.f32 %v1313, %v1601
    %v1698 = vmul.f32 %v1314, %v1602
    %v1699 = vmul.f32 %v1315, %v1603
    %v1700 = vmul.f32 %v1316, %v1604
    %v1701 = vmul.f32 %v1317, %v1605
    %v1702 = vmul.f32 %v1318, %v1606
    %v1703 = vmul.f32 %v1319, %v1607
    %v1704 = vmul.f32 %v1320, %v1608
    %v1705 = vmul.f32 %v1321, %v1609
    %v1706 = vmul.f32 %v1322, %v1610
    %v1707 = vmul.f32 %v1323, %v1611
    %v1708 = vmul.f32 %v1324, %v1612
    %v1709 = vmul.f32 %v1325, %v1613
    %v1710 = vmul.f32 %v1326, %v1614
    %v1711 = vmul.f32 %v1327, %v1615
    %v1712 = vmul.f32 %v1328, %v1616
    %v1713 = vmul.f32 %v1329, %v1617
    %v1714 = vmul.f32 %v1330, %v1618
    %v1715 = vmul.f32 %v1331, %v1619
    %v1716 = vmul.f32 %v1332, %v1620
    %v1717 = vmul.f32 %v1333, %v1621
    %v1718 = vmul.f32 %v1334, %v1622
    %v1719 = vmul.f32 %v1335, %v1623
    %v1720 = vmul.f32 %v1336, %v1624
    %v1721 = vmul.f32 %v1337, %v1625
    %v1722 = vmul.f32 %v1338, %v1626
    %v1723 = vmul.f32 %v1339, %v1627
    %v1724 = vmul.f32 %v1340, %v1628
    %v1725 = vmul.f32 %v1341, %v1629
    %v1726 = vmul.f32 %v1342, %v1630
    %v1727 = vmul.f32 %v1343, %v1631
    %v1728 = vmul.f32 %v1344, %v1632
    %v1729 = vmul.f32 %v1345, %v1633
    %v1730 = vmul.f32 %v1346, %v1634
    %v1731 = vmul.f32 %v1347, %v1635
    %v1732 = vmul.f32 %v1348, %v1636
    %v1733 = vmul.f32 %v1349, %v1637
    %v1734 = vmul.f32 %v1350, %v1638
    %v1735 = vmul.f32 %v1351, %v1639
    %v1736 = vmul.f32 %v1352, %v1640
    %v1737 = vmul.f32 %v1353, %v1641
    %v1738 = vmul.f32 %v1354, %v1642
    %v1739 = vmul.f32 %v1355, %v1643
    %v1740 = vmul.f32 %v1356, %v1644
    %v1741 = vmul.f32 %v1357, %v1645
    %v1742 = vld [vmem:[%s3] sm:$0xff]
    %v1743 = vld [vmem:[%s3 + $0x8] sm:$0xff]
    %v1744 = vld [vmem:[%s3 + $0x10] sm:$0xff]
    %v1745 = vld [vmem:[%s3 + $0x18] sm:$0xff]
    %v1746 = vld [vmem:[%s3 + $0x20] sm:$0xff]
    %v1747 = vld [vmem:[%s3 + $0x28] sm:$0xff]
    %v1748 = vld [vmem:[%s4] sm:$0xff]
    %v1749 = vld [vmem:[%s4 + $0x8] sm:$0xff]
    %1751 = vset.pattern.permute.xlu0 0
    %1752 = vperm.xlu0 %1751, %v1748
    %v1753 = vpop.permute.xlu0 %1752
    %1756 = vset.pattern.permute.xlu0 0
    %1757 = vperm.xlu0 %1756, %v1749
    %v1758 = vpop.permute.xlu0 %1757
    %1760 = vmatprep.subr.mxu0 %v1647
    %1761 = vmatpush1.msra.mxu0 %v1646
    %1762 = vmatprep.subr.mxu0 %v1649
    %1763 = vmatpush1.msra.mxu0 %v1648
    %1764 = vmatprep.subr.mxu0 %v1651
    %1765 = vmatpush1.msra.mxu0 %v1650
    %1766 = vmatprep.subr.mxu0 %v1653
    %1767 = vmatpush1.msra.mxu0 %v1652
    %1768 = vmatprep.subr.mxu0 %v1655
    %1769 = vmatpush1.msra.mxu0 %v1654
    %1770 = vmatprep.subr.mxu0 %v1657
    %1771 = vmatpush1.msra.mxu0 %v1656
    %1772 = vmatprep.subr.mxu0 %v1659
    %1773 = vmatpush1.msra.mxu0 %v1658
    %1774 = vmatprep.subr.mxu0 %v1661
    %1775 = vmatpush1.msra.mxu0 %v1660
    %1776 = vmatprep.subr.mxu0 %v1663
    %1777 = vmatpush1.msra.mxu0 %v1662
    %1778 = vmatprep.subr.mxu0 %v1665
    %1779 = vmatpush1.msra.mxu0 %v1664
    %1780 = vmatprep.subr.mxu0 %v1667
    %1781 = vmatpush1.msra.mxu0 %v1666
    %1782 = vmatprep.subr.mxu0 %v1669
    %1783 = vmatpush1.msra.mxu0 %v1668
    %1784 = vmatprep.subr.mxu0 %v1671
    %1785 = vmatpush1.msra.mxu0 %v1670
    %1786 = vmatprep.subr.mxu0 %v1673
    %1787 = vmatpush1.msra.mxu0 %v1672
    %1788 = vmatprep.subr.mxu0 %v1675
    %1789 = vmatpush1.msra.mxu0 %v1674
    %1790 = vmatprep.subr.mxu0 %v1677
    %1791 = vmatpush1.msra.mxu0 %v1676
    %1792 = vmatprep.subr.mxu0 %v1679
    %1793 = vmatpush1.msra.mxu0 %v1678
    %1794 = vmatprep.subr.mxu0 %v1681
    %1795 = vmatpush1.msra.mxu0 %v1680
    %1796 = vmatprep.subr.mxu0 %v1683
    %1797 = vmatpush1.msra.mxu0 %v1682
    %1798 = vmatprep.subr.mxu0 %v1685
    %1799 = vmatpush1.msra.mxu0 %v1684
    %1800 = vmatprep.subr.mxu0 %v1687
    %1801 = vmatpush1.msra.mxu0 %v1686
    %1802 = vmatprep.subr.mxu0 %v1689
    %1803 = vmatpush1.msra.mxu0 %v1688
    %1804 = vmatprep.subr.mxu0 %v1691
    %1805 = vmatpush1.msra.mxu0 %v1690
    %1806 = vmatprep.subr.mxu0 %v1693
    %1807 = vmatpush1.msra.mxu0 %v1692
    %1808 = vmatprep.subr.mxu0 %v1695
    %1809 = vmatpush1.msra.mxu0 %v1694
    %1810 = vmatprep.subr.mxu0 %v1697
    %1811 = vmatpush1.msra.mxu0 %v1696
    %1812 = vmatprep.subr.mxu0 %v1699
    %1813 = vmatpush1.msra.mxu0 %v1698
    %1814 = vmatprep.subr.mxu0 %v1701
    %1815 = vmatpush1.msra.mxu0 %v1700
    %1816 = vmatprep.subr.mxu0 %v1703
    %1817 = vmatpush1.msra.mxu0 %v1702
    %1818 = vmatprep.subr.mxu0 %v1705
    %1819 = vmatpush1.msra.mxu0 %v1704
    %1820 = vmatprep.subr.mxu0 %v1707
    %1821 = vmatpush1.msra.mxu0 %v1706
    %1822 = vmatprep.subr.mxu0 %v1709
    %1823 = vmatpush1.msra.mxu0 %v1708
    %1824 = vmatprep.mubr.f32.mxu0 %v1743
    %1825 = vmatmul.mubr.f32.gmra.mrb[0].mxu0 %v1742
    %v1826 = vpop.f32.mrb[0].mxu0
    %v1827 = vadd.f32 %v1753, %v1826
    %v1828 = vpop.f32.mrb[0].mxu0
    %v1829 = vadd.f32 %v1753, %v1828
    %1830 = vmatprep.mubr.f32.mxu0 %v1746
    %1831 = vmatmul.mubr.f32.gmra.mrb[0].mxu0 %v1745
    %v1832 = vpop.f32.mrb[0].mxu0
    %v1833 = vadd.f32 %v1758, %v1832
    %v1834 = vpop.f32.mrb[0].mxu0
    %v1835 = vadd.f32 %v1758, %v1834
    %1836 = vdwg.mxu0
    %1837 = vmatprep.subr.mxu0 %v1711
    %1838 = vmatpush1.msra.mxu0 %v1710
    %1839 = vmatprep.subr.mxu0 %v1713
    %1840 = vmatpush1.msra.mxu0 %v1712
    %1841 = vmatprep.subr.mxu0 %v1715
    %1842 = vmatpush1.msra.mxu0 %v1714
    %1843 = vmatprep.subr.mxu0 %v1717
    %1844 = vmatpush1.msra.mxu0 %v1716
    %1845 = vmatprep.subr.mxu0 %v1719
    %1846 = vmatpush1.msra.mxu0 %v1718
    %1847 = vmatprep.subr.mxu0 %v1721
    %1848 = vmatpush1.msra.mxu0 %v1720
    %1849 = vmatprep.subr.mxu0 %v1723
    %1850 = vmatpush1.msra.mxu0 %v1722
    %1851 = vmatprep.subr.mxu0 %v1725
    %1852 = vmatpush1.msra.mxu0 %v1724
    %1853 = vmatprep.subr.mxu0 %v1727
    %1854 = vmatpush1.msra.mxu0 %v1726
    %1855 = vmatprep.subr.mxu0 %v1729
    %1856 = vmatpush1.msra.mxu0 %v1728
    %1857 = vmatprep.subr.mxu0 %v1731
    %1858 = vmatpush1.msra.mxu0 %v1730
    %1859 = vmatprep.subr.mxu0 %v1733
    %1860 = vmatpush1.msra.mxu0 %v1732
    %1861 = vmatprep.subr.mxu0 %v1735
    %1862 = vmatpush1.msra.mxu0 %v1734
    %1863 = vmatprep.subr.mxu0 %v1737
    %1864 = vmatpush1.msra.mxu0 %v1736
    %1865 = vmatprep.subr.mxu0 %v1739
    %1866 = vmatpush1.msra.mxu0 %v1738
    %1867 = vmatprep.subr.mxu0 %v1741
    %1868 = vmatpush1.msra.mxu0 %v1740
    %1869 = vmatprep.subr.mxu0 0.0
    %1870 = vmatpush1.msra.mxu0 0.0
    %1871 = vmatprep.subr.mxu0 0.0
    %1872 = vmatpush1.msra.mxu0 0.0
    %1873 = vmatprep.subr.mxu0 0.0
    %1874 = vmatpush1.msra.mxu0 0.0
    %1875 = vmatprep.subr.mxu0 0.0
    %1876 = vmatpush1.msra.mxu0 0.0
    %1877 = vmatprep.subr.mxu0 0.0
    %1878 = vmatpush1.msra.mxu0 0.0
    %1879 = vmatprep.subr.mxu0 0.0
    %1880 = vmatpush1.msra.mxu0 0.0
    %1881 = vmatprep.subr.mxu0 0.0
    %1882 = vmatpush1.msra.mxu0 0.0
    %1883 = vmatprep.subr.mxu0 0.0
    %1884 = vmatpush1.msra.mxu0 0.0
    %1885 = vmatprep.subr.mxu0 0.0
    %1886 = vmatpush1.msra.mxu0 0.0
    %1887 = vmatprep.subr.mxu0 0.0
    %1888 = vmatpush1.msra.mxu0 0.0
    %1889 = vmatprep.subr.mxu0 0.0
    %1890 = vmatpush1.msra.mxu0 0.0
    %1891 = vmatprep.subr.mxu0 0.0
    %1892 = vmatpush1.msra.mxu0 0.0
    %1893 = vmatprep.subr.mxu0 0.0
    %1894 = vmatpush1.msra.mxu0 0.0
    %1895 = vmatprep.subr.mxu0 0.0
    %1896 = vmatpush1.msra.mxu0 0.0
    %1897 = vmatprep.subr.mxu0 0.0
    %1898 = vmatpush1.msra.mxu0 0.0
    %1899 = vmatprep.subr.mxu0 0.0
    %1900 = vmatpush1.msra.mxu0 0.0
    %1901 = vmatprep.mubr.f32.mxu0 0.0
    %1902 = vmatmul.mubr.f32.gmra.mrb[0].mxu0 %v1744
    %v1903 = vpop.f32.mrb[0].mxu0
    %v1904 = vadd.f32 %v1827, %v1903
    %v1905 = vpop.f32.mrb[0].mxu0
    %v1906 = vadd.f32 %v1829, %v1905
    %1907 = vmatprep.mubr.f32.mxu0 0.0
    %1908 = vmatmul.mubr.f32.gmra.mrb[0].mxu0 %v1747
    %v1909 = vpop.f32.mrb[0].mxu0
    %v1910 = vadd.f32 %v1833, %v1909
    %v1911 = vpop.f32.mrb[0].mxu0
    %v1912 = vadd.f32 %v1835, %v1911
    %1913 = vdwg.mxu0
    %v1916 = vrot.slane %v1904, 7
    %v1917 = vrot.slane %v1906, 7
    %vm1920 = vcmp.gt.f32.partialorder %v1904, %v1916
    %vm1921 = vcmp.gt.f32.partialorder %v1906, %v1917
    %v1922 = vsel %vm1920, %v1904, %v1916
    %v1923 = vsel %vm1921, %v1906, %v1917
    %v1924 = vsel %vm1920, 1, 0
    %v1925 = vsel %vm1921, 1, 0
    %v1928 = vrot.slane %v1922, 7
    %v1929 = vrot.slane %v1923, 7
    %vm1932 = vcmp.gt.f32.partialorder %v1904, %v1928
    %vm1933 = vcmp.gt.f32.partialorder %v1906, %v1929
    %v1934 = vsel %vm1932, %v1904, %v1928
    %v1935 = vsel %vm1933, %v1906, %v1929
    %v1936 = vrot.slane %v1924, 7
    %v1937 = vrot.slane %v1925, 7
    %v1938 = vsel %vm1932, 2, %v1936
    %v1939 = vsel %vm1933, 2, %v1937
    %v1942 = vrot.slane %v1934, 7
    %v1943 = vrot.slane %v1935, 7
    %vm1946 = vcmp.gt.f32.partialorder %v1904, %v1942
    %vm1947 = vcmp.gt.f32.partialorder %v1906, %v1943
    %v1948 = vsel %vm1946, %v1904, %v1942
    %v1949 = vsel %vm1947, %v1906, %v1943
    %v1950 = vrot.slane %v1938, 7
    %v1951 = vrot.slane %v1939, 7
    %v1952 = vsel %vm1946, 3, %v1950
    %v1953 = vsel %vm1947, 3, %v1951
    %v1956 = vrot.slane %v1948, 7
    %v1957 = vrot.slane %v1949, 7
    %vm1960 = vcmp.gt.f32.partialorder %v1904, %v1956
    %vm1961 = vcmp.gt.f32.partialorder %v1906, %v1957
    %v1962 = vsel %vm1960, %v1904, %v1956
    %v1963 = vsel %vm1961, %v1906, %v1957
    %v1964 = vrot.slane %v1952, 7
    %v1965 = vrot.slane %v1953, 7
    %v1966 = vsel %vm1960, 4, %v1964
    %v1967 = vsel %vm1961, 4, %v1965
    %v1970 = vrot.slane %v1962, 7
    %v1971 = vrot.slane %v1963, 7
    %vm1974 = vcmp.gt.f32.partialorder %v1904, %v1970
    %vm1975 = vcmp.gt.f32.partialorder %v1906, %v1971
    %v1976 = vrot.slane %v1966, 7
    %v1977 = vrot.slane %v1967, 7
    %v1978 = vsel %vm1974, 5, %v1976
    %v1979 = vsel %vm1975, 5, %v1977
    %v1980 = vcombine.high %v1978, %v1979
    %v1982 = vunpack.c.l.s4 1966171168
    %v1983 = vunpack.c.0.s8 %v1982
    %v1984 = vlaneseq
    %v1985 = vshrl.u32 %v1984, 7
    %v1986 = vsub.s32 %v1983, %v1985
    %v1987 = vrot.slane %v1980, %v1986
    %v1988 = vcombine.high %v1987, %v1987
    %v1990 = vunpack.c.l.s4 1966171168
    %v1991 = vunpack.c.0.s8 %v1990
    %v1992 = vlaneseq
    %v1993 = vshrl.u32 %v1992, 7
    %v1994 = vsub.s32 %v1991, %v1993
    %v1995 = vrot.slane %v1988, %v1994
    %v1996 = vlaneseq
    %vm1997 = vcmp.ge.s32.totalorder %v1996, 0
    %vm1998 = vcmp.lt.s32.totalorder %v1996, 200
    %vm1999 = vmand %vm1997, %vm1998
    %2000 = vst.msk [vmem:[#allocation7] ss:$2 sm:$0x3] %vm1999, %v1995
    %v2003 = vrot.slane %v1910, 7
    %v2004 = vrot.slane %v1912, 7
    %vm2007 = vcmp.gt.f32.partialorder %v1910, %v2003
    %vm2008 = vcmp.gt.f32.partialorder %v1912, %v2004
    %v2009 = vsel %vm2007, %v1910, %v2003
    %v2010 = vsel %vm2008, %v1912, %v2004
    %v2011 = vsel %vm2007, 1, 0
    %v2012 = vsel %vm2008, 1, 0
    %v2015 = vrot.slane %v2009, 7
    %v2016 = vrot.slane %v2010, 7
    %vm2019 = vcmp.gt.f32.partialorder %v1910, %v2015
    %vm2020 = vcmp.gt.f32.partialorder %v1912, %v2016
    %v2021 = vrot.slane %v2011, 7
    %v2022 = vrot.slane %v2012, 7
    %v2023 = vsel %vm2019, 2, %v2021
    %v2024 = vsel %vm2020, 2, %v2022
    %v2025 = vcombine.low %v2023, %v2024
    %v2027 = vunpack.c.l.s4 1966171168
    %v2028 = vunpack.c.0.s8 %v2027
    %v2029 = vlaneseq
    %v2030 = vshrl.u32 %v2029, 7
    %v2031 = vsub.s32 %v2028, %v2030
    %v2032 = vrot.slane %v2025, %v2031
    %v2034 = vunpack.c.l.s4 1966171168
    %v2035 = vunpack.c.0.s8 %v2034
    %v2036 = vlaneseq
    %v2037 = vshrl.u32 %v2036, 7
    %v2038 = vsub.s32 %v2035, %v2037
    %v2039 = vrot.slane %v2032, %v2038
    %v2040 = vcombine.high %v2039, %v2039
    %s2041 = scalar_lea.vmem [#allocation7], 1
    %2042 = vst.msk [vmem:[%s2041] ss:$2 sm:$0x3] %vm1999, %v2040
    // Predicated region
    $region30: #{tpu_custom_call.1} parent=1 // pred_check
      _
    $region31: #{tpu_custom_call.1} parent=1 // pred_check_branch
      %2044 = sbr.rel (0) target = $region33
    $region32: #{tpu_custom_call.1} parent=1 // pred_region
      %s2046 = ssub.s32 64, 64
      %2047 = vsyncadd [#allocation4], %s2046
      %s2049 = sshll.u32 [#allocation7], 4
      %s2050 = int_to_ptr.vmem [resolvable:$true] %s2049
      %2052 = dma.vmem_to_hbm [thread:$0]  %s2050, 64, %s5, [#allocation4]
    $region33: #{tpu_custom_call.1} parent=1 // pred_fallthru
      _
    // Predicated region
    $region34: #{tpu_custom_call.1} parent=1 // pred_check
      _
    $region35: #{tpu_custom_call.1} parent=1 // pred_check_branch
      %2054 = sbr.rel (0) target = $region37
    $region36: #{tpu_custom_call.1} parent=1 // pred_region
      %2055 = dma.done [#allocation4], 64
    $region37: #{tpu_custom_call.1} parent=1 // pred_fallthru
      _
    %2056 = vsyncpa [#allocation3], 1
    %2057 = vsyncpa [#allocation6], 1
    %2058 = vsyncpa [#allocation4], 1

</llo_original>
